<compile_context>
chip_gen: v7x
topology: tpu7x:2x2x1
jax: 0.10.0
libtpu: 0.0.40
codegen_flags: <defaults>
</compile_context>

<pallas_src>
import jax
import jax.numpy as jnp
from jax import lax
from jax.experimental import pallas as pl
from jax.experimental.pallas import tpu as pltpu


def _conv1x1_kernel(w_ref, x_ref, o_ref):
    # w_ref: (tile_cout, C_in)  prepared weight (bf16 by default)
    # x_ref: (C_in,  H*W)       f32 activations (VMEM-resident across steps)
    # o_ref: (tile_cout, H*W)   f32
    o_ref[...] = jnp.dot(
        w_ref[...],
        x_ref[...].astype(w_ref.dtype),   # tiny in-VMEM cast, hidden under MXU
        preferred_element_type=jnp.float32,
    )


def prepare_weight(weight_oihw, dtype=jnp.bfloat16):
    """Init-time weight prep (call ONCE): (C_out,C_in,1,1) -> (C_out,C_in), cast.

    Pass dtype=jnp.float32 for exact f32 compute (slower MXU path)."""
    c_out, c_in = weight_oihw.shape[0], weight_oihw.shape[1]
    return weight_oihw.reshape(c_out, c_in).astype(dtype)


def conv2d_1x1(x_nchw, w_mat):
    """1x1 conv, stride 1, no bias. NCHW in/out (PyTorch Conv2d semantics).

    `w_mat` must be the (C_out, C_in) matrix from prepare_weight(); no casts
    or transposes are emitted per call."""
    n, c_in, h, w = x_nchw.shape
    c_out = w_mat.shape[0]
    hw = h * w
    out_dtype = jnp.float32

    cost = pl.CostEstimate(
        flops=2 * n * c_out * c_in * hw,
        transcendentals=0,
        bytes_accessed=(w_mat.size * w_mat.dtype.itemsize
                        + x_nchw.size * x_nchw.dtype.itemsize
                        + n * c_out * hw * 4),
    )
    vmem_limit = 8 * 1024 * 1024  # actual buffers ~1.3 MiB; generous headroom

    if n == 1:
        x2d = x_nchw.reshape(c_in, hw)
        # Split C_out into 128-row blocks (grid=(2,) for 232) so the weight
        # DMA — the bulk of the HBM traffic — overlaps the previous block's
        # matmul. x has a constant index map so it is fetched once.
        tile_cout = c_out if c_out <= 128 else 128
        grid = (pl.cdiv(c_out, tile_cout),)
        out = pl.pallas_call(
            _conv1x1_kernel,
            out_shape=jax.ShapeDtypeStruct((c_out, hw), out_dtype),
            grid=grid,
            in_specs=[
                pl.BlockSpec((tile_cout, c_in), lambda i: (i, 0)),
                pl.BlockSpec((c_in, hw), lambda i: (0, 0)),   # resident
            ],
            out_specs=pl.BlockSpec((tile_cout, hw), lambda i: (i, 0)),
            compiler_params=pltpu.CompilerParams(
                dimension_semantics=("parallel",),
                vmem_limit_bytes=vmem_limit,
            ),
            cost_estimate=cost,
        )(w_mat, x2d)
        return out.reshape(1, c_out, h, w)

    # Batched path: grid over N (shards across v7x's two TensorCores); the
    # weight block index is constant so it stays VMEM-resident.
    x3d = x_nchw.reshape(n, c_in, hw)
    out = pl.pallas_call(
        _conv1x1_kernel,
        out_shape=jax.ShapeDtypeStruct((n, c_out, hw), out_dtype),
        grid=(n,),
        in_specs=[
            pl.BlockSpec((c_out, c_in), lambda b: (0, 0)),       # resident
            pl.BlockSpec((None, c_in, hw), lambda b: (b, 0, 0)),
        ],
        out_specs=pl.BlockSpec((None, c_out, hw), lambda b: (b, 0, 0)),
        compiler_params=pltpu.CompilerParams(
            dimension_semantics=("parallel",),
            vmem_limit_bytes=vmem_limit,
        ),
        cost_estimate=cost,
    )(w_mat, x3d)
    return out.reshape(n, c_out, h, w)


if __name__ == "__main__":
    N, C_IN, H, W = 1, 1392, 7, 7
    C_OUT = 232

    key = jax.random.PRNGKey(0)
    kx, kw = jax.random.split(key)

    x333 = jax.random.normal(kx, (N, C_IN, H, W), dtype=jnp.float32)
    # Deterministic weight init (Kaiming-uniform-like scale for a 1x1 conv).
    bound = 1.0 / (C_IN ** 0.5)
    conv_w = jax.random.uniform(
        kw, (C_OUT, C_IN, 1, 1), minval=-bound, maxval=bound, dtype=jnp.float32
    )

    # --- init time (outside the per-call hot path): prep/cast weight once ---
    w_mat = prepare_weight(conv_w, dtype=jnp.bfloat16)

    conv = jax.jit(conv2d_1x1)
    y = jax.block_until_ready(conv(x333, w_mat))
    assert y.shape == (N, C_OUT, H, W), y.shape

    # Check 1 (tight): vs a JAX f32 conv whose inputs are rounded to bf16 the
    # same way the kernel rounds them (MXU accumulates in f32).
    w_bf = conv_w.astype(jnp.bfloat16).astype(jnp.float32)
    x_bf = x333.astype(jnp.bfloat16).astype(jnp.float32)
    ref_bf = lax.conv_general_dilated(
        x_bf, w_bf, window_strides=(1, 1), padding="VALID",
        dimension_numbers=("NCHW", "OIHW", "NCHW"),
    )
    assert jnp.allclose(y, ref_bf, atol=2e-3, rtol=2e-3), (
        float(jnp.max(jnp.abs(y - ref_bf)))
    )

    # Check 2 (loose): vs the full-f32 PyTorch module semantics; the gap is
    # bounded by bf16 input rounding with f32 accumulation (documented).
    ref_f32 = lax.conv_general_dilated(
        x333, conv_w, window_strides=(1, 1), padding="VALID",
        dimension_numbers=("NCHW", "OIHW", "NCHW"),
    )
    assert jnp.allclose(y, ref_f32, atol=5e-2, rtol=5e-2), (
        float(jnp.max(jnp.abs(y - ref_f32)))
    )

    # Exercise the batched (grid over N) path once, at a small size.
    xb = jax.random.normal(kx, (2, C_IN, H, W), dtype=jnp.float32)
    yb = jax.block_until_ready(conv(xb, w_mat))
    xb_bf = xb.astype(jnp.bfloat16).astype(jnp.float32)
    refb = lax.conv_general_dilated(
        xb_bf, w_bf, window_strides=(1, 1), padding="VALID",
        dimension_numbers=("NCHW", "OIHW", "NCHW"),
    )
    assert yb.shape == (2, C_OUT, H, W)
    assert jnp.allclose(yb, refb, atol=2e-3, rtol=2e-3)

    print("KERNEL_OK")
</pallas_src>

<mosaic_0001>
module attributes {stable_mosaic.version = 11 : i64} {
  func.func @_conv1x1_kernel(%arg0: i32, %arg1: memref<128x1392xbf16, #tpu.memory_space<vmem>>, %arg2: memref<1392x49xf32, #tpu.memory_space<vmem>>, %arg3: memref<128x49xf32, #tpu.memory_space<vmem>>) attributes {dimension_semantics = [#tpu.dimension_semantics<parallel>], iteration_bounds = array<i64: 2>, scalar_prefetch = 0 : i64, scratch_operands = 0 : i64, tpu.core_type = #tpu.core_type<tc>, window_params = [{transform_indices = @transform_0, window_bounds = array<i64: 128, 1392>}, {pipeline_mode = #tpu.pipeline_mode<synchronous>, transform_indices = @transform_1, window_bounds = array<i64: 1392, 49>}, {transform_indices = @transform_2, window_bounds = array<i64: 128, 49>}]} {
    %c0 = arith.constant 0 : index
    %c0_0 = arith.constant 0 : index
    %0 = vector.load %arg1[%c0, %c0_0] : memref<128x1392xbf16, #tpu.memory_space<vmem>>, vector<128x1392xbf16>
    %c0_1 = arith.constant 0 : index
    %c0_2 = arith.constant 0 : index
    %1 = vector.load %arg2[%c0_1, %c0_2] : memref<1392x49xf32, #tpu.memory_space<vmem>>, vector<1392x49xf32>
    %2 = arith.truncf %1 : vector<1392x49xf32> to vector<1392x49xbf16>
    %cst = arith.constant dense<0.000000e+00> : vector<128x49xf32>
    %3 = tpu.matmul %0, %2, %cst {dimension_numbers = #tpu.dot_dimension_numbers<[1], [0], [0], [1], [0, 0, 1, 1], [], []>} : vector<128x1392xbf16>, vector<1392x49xbf16>, vector<128x49xf32> -> vector<128x49xf32>
    %c0_3 = arith.constant 0 : index
    %c0_4 = arith.constant 0 : index
    %4 = vector.load %arg3[%c0_3, %c0_4] : memref<128x49xf32, #tpu.memory_space<vmem>>, vector<128x49xf32>
    tpu.vector_store %arg3[%c0_3, %c0_4], %3 {strides = array<i32>} : memref<128x49xf32, #tpu.memory_space<vmem>>, vector<128x49xf32>,
    return
  }
  func.func @transform_0(%arg0: i32) -> (i32, i32) {
    %c0_i32 = arith.constant 0 : i32
    %c0_i32_0 = arith.constant 0 : i32
    return %arg0, %c0_i32 : i32, i32
  }
  func.func @transform_1(%arg0: i32) -> (i32, i32) {
    %c0_i32 = arith.constant 0 : i32
    %c0_i32_0 = arith.constant 0 : i32
    %c0_i32_1 = arith.constant 0 : i32
    return %c0_i32, %c0_i32_0 : i32, i32
  }
  func.func @transform_2(%arg0: i32) -> (i32, i32) {
    %c0_i32 = arith.constant 0 : i32
    %c0_i32_0 = arith.constant 0 : i32
    return %arg0, %c0_i32 : i32, i32
  }
}

</mosaic_0001>

<llo_original>
// kernel: conv2d_1x1.1
$region0: #{conv2d_1x1.1}
  #allocation0 [shape = 'u32[]', space=smem, size = 0x4, offset = 0x4, fixed_abs, tag = 'smem constant byte address 0x4 - core index']
  #allocation1 [shape = 'u32[144,128]{1,0:T(1,128)}', space=vmem, size = 0x12000, scoped, tag = 'internal scratch']
  %s0 = inlined_call_operand.vmem [shape: bf16[232,1392], index: 0, kind: input, shape index: {}]
  %s1 = inlined_call_operand.vmem [shape: f32[1392,49], index: 1, kind: input, shape index: {}]
  %s2 = inlined_call_operand.vmem [shape: f32[232,49], index: 2, kind: output, shape index: {}]
  %s3 = sld [smem:[#allocation0]]
  $region89: #{conv2d_1x1.1} parent=0
    _
  %s5 = ssub.s32 1, %s3
  %s6 = scalar_select 0, %s5, %s3
  $region1: #{conv2d_1x1.1} parent=0
    #allocation2 [shape = 'u8[131072]{0}', space=vmem, size = 0x20000, scoped, tag = 'output window, operand 0']
    loop: start=0, step=1, limit=4
    $region2: #{conv2d_1x1.1} parent=1 // loop_pre_header
      _
    $region3: #{conv2d_1x1.1} parent=1 // loop_header
      %s8 = sphi 0, %s12
      %p9 = scmp.ge.s32.totalorder %s8, 4
      %s18 = sphi 0, %s20
      %s21 = sphi 0, %s18
      %s22 = sphi 0, %s21
      %s38 = sphi 0, %s22
      %s42 = sphi 0, %s42
      %s44 = sphi 0, %s42
      %s45 = sphi 0, %s44
      %s59 = sphi 0, %s45
      %s65 = sphi 0, %s67
      %s68 = sphi 0, %s65
      %s69 = sphi 0, %s68
      %s85 = sphi 0, %s69
    $region4: #{conv2d_1x1.1} parent=1 // loop_header_branch
      %11 = sbr.rel (%p9) target = $region8
    $region5: #{conv2d_1x1.1} parent=1 // loop_body
      %s13 = ssub.s32 %s8, 1
      %s14 = ssub.s32 %s8, 2
      %s15 = sadd.s32 %s8, 1
      %s16 = ssub.s32 %s8, %s15
      %p17 = scmp.eq.s32.totalorder %s16, 0
      %s19 = sadd.s32 %s18, 1
      %s20 = scalar_select %p17, %s18, %s19
      %p23 = pneg %p17
      %p24 = scmp.eq.s32.totalorder %s8, 1
      %p25 = por %p23, %p24
      %p26 = scmp.ne.s32.totalorder %s18, %s21
      %p27 = scmp.eq.s32.totalorder %s8, 0
      %p28 = por %p26, %p27
      %p29 = scmp.ne.s32.totalorder %s18, %s21
      %p30 = scmp.eq.s32.totalorder %s13, 1
      %p31 = por %p29, %p30
      %p32 = scmp.ne.s32.totalorder %s21, %s22
      %p33 = scmp.eq.s32.totalorder %s13, 0
      %p34 = por %p32, %p33
      %p35 = scmp.ne.s32.totalorder %s21, %s22
      %p36 = scmp.eq.s32.totalorder %s14, 1
      %p37 = por %p35, %p36
      %p39 = scmp.ne.s32.totalorder %s22, %s38
      %p40 = scmp.eq.s32.totalorder %s14, 0
      %p41 = por %p39, %p40
      %s43 = sadd.s32 %s42, 1
      %p46 = scmp.eq.s32.totalorder %s8, 1
      %p47 = scmp.ne.s32.totalorder %s42, %s44
      %p48 = scmp.eq.s32.totalorder %s8, 0
      %p49 = por %p47, %p48
      %p50 = scmp.ne.s32.totalorder %s42, %s44
      %p51 = scmp.eq.s32.totalorder %s13, 1
      %p52 = por %p50, %p51
      %p53 = scmp.ne.s32.totalorder %s44, %s45
      %p54 = scmp.eq.s32.totalorder %s13, 0
      %p55 = por %p53, %p54
      %p56 = scmp.ne.s32.totalorder %s44, %s45
      %p57 = scmp.eq.s32.totalorder %s14, 1
      %p58 = por %p56, %p57
      %p60 = scmp.ne.s32.totalorder %s45, %s59
      %p61 = scmp.eq.s32.totalorder %s14, 0
      %p62 = por %p60, %p61
      %s63 = ssub.s32 %s8, %s15
      %p64 = scmp.eq.s32.totalorder %s63, 0
      %s66 = sadd.s32 %s65, 1
      %s67 = scalar_select %p64, %s65, %s66
      %p70 = pneg %p64
      %p71 = scmp.eq.s32.totalorder %s8, 1
      %p72 = por %p70, %p71
      %p73 = scmp.ne.s32.totalorder %s65, %s68
      %p74 = scmp.eq.s32.totalorder %s8, 0
      %p75 = por %p73, %p74
      %p76 = scmp.ne.s32.totalorder %s65, %s68
      %p77 = scmp.eq.s32.totalorder %s13, 1
      %p78 = por %p76, %p77
      %p79 = scmp.ne.s32.totalorder %s68, %s69
      %p80 = scmp.eq.s32.totalorder %s13, 0
      %p81 = por %p79, %p80
      %p82 = scmp.ne.s32.totalorder %s68, %s69
      %p83 = scmp.eq.s32.totalorder %s14, 1
      %p84 = por %p82, %p83
      %p86 = scmp.ne.s32.totalorder %s69, %s85
      %p87 = scmp.eq.s32.totalorder %s14, 0
      %p88 = por %p86, %p87
      %p89 = scmp.le.s32.totalorder 1, %s8
      %p90 = scmp.lt.s32.totalorder %s8, 3
      %p91 = pnand %p89, %p90
      %p92 = pneg %p91
      // Predicated region
      $region9: #{conv2d_1x1.1} parent=5 // pred_check
        _
      $region10: #{conv2d_1x1.1} parent=5 // pred_check_branch
        %94 = sbr.rel (%p91) target = $region12
      $region11: #{conv2d_1x1.1} parent=5 // pred_region
        %s95 = ssub.s32 %s8, 1
        // Predicated region
        $region13: #{conv2d_1x1.1} parent=11 // pred_check
          %p96 = pneg %p55
        $region14: #{conv2d_1x1.1} parent=11 // pred_check_branch
          %98 = sbr.rel (%p96) target = $region16
        $region15: #{conv2d_1x1.1} parent=11 // pred_region
          _
        $region16: #{conv2d_1x1.1} parent=11 // pred_fallthru
          _
      $region12: #{conv2d_1x1.1} parent=5 // pred_fallthru
        _
      %p99 = scmp.lt.s32.totalorder %s8, 2
      // Predicated region
      $region17: #{conv2d_1x1.1} parent=5 // pred_check
        %p100 = pneg %p99
      $region18: #{conv2d_1x1.1} parent=5 // pred_check_branch
        %102 = sbr.rel (%p100) target = $region20
      $region19: #{conv2d_1x1.1} parent=5 // pred_region
        // Predicated region
        $region21: #{conv2d_1x1.1} parent=19 // pred_check
          %p103 = pneg %p28
        $region22: #{conv2d_1x1.1} parent=19 // pred_check_branch
          %105 = sbr.rel (%p103) target = $region24
        $region23: #{conv2d_1x1.1} parent=19 // pred_region
          %s106 = smul.u32 16, %s8
          %s107 = ssub.s32 29, %s106
          %p108 = scmp.lt.s32.totalorder %s107, 16
          %s109 = scalar_select %p108, %s107, 16
          %s110 = smul.u32 64, %s109
          %s111 = smul.u32 %s110, 11
          %p112 = scmp.lt.s32.totalorder %s106, 28
          %s113 = scalar_select %p112, %s106, 28
          %s114 = smul.addr %s113, 11
          %s115 = smul.addr %s114, 4
          %s116 = scalar_lea.vmem %s0, %s115
          %s117 = smul.u32 16, %s8
          %s118 = ssub.s32 29, %s117
          %p119 = scmp.lt.s32.totalorder %s118, 16
          %s120 = scalar_select %p119, %s118, 16
          %s121 = smul.u32 64, %s120
          %s122 = smul.u32 %s121, 11
        $region24: #{conv2d_1x1.1} parent=19 // pred_fallthru
          _
      $region20: #{conv2d_1x1.1} parent=5 // pred_fallthru
        _
      %p123 = scmp.le.s32.totalorder 1, %s8
      %p124 = scmp.lt.s32.totalorder %s8, 3
      %p125 = pnand %p123, %p124
      %p126 = pneg %p125
      // Predicated region
      $region25: #{conv2d_1x1.1} parent=5 // pred_check
        _
      $region26: #{conv2d_1x1.1} parent=5 // pred_check_branch
        %128 = sbr.rel (%p125) target = $region28
      $region27: #{conv2d_1x1.1} parent=5 // pred_region
        %s129 = ssub.s32 %s8, 1
        %s130 = smul.u32 16, %s13
        %s131 = ssub.s32 29, %s130
        %p132 = scmp.lt.s32.totalorder %s131, 16
        %s133 = scalar_select %p132, %s131, 16
        %s134 = smul.u32 64, %s133
        %s135 = smul.u32 %s134, 11
        %p136 = scmp.lt.s32.totalorder %s130, 28
        %s137 = scalar_select %p136, %s130, 28
        %s138 = smul.addr %s137, 11
        %s139 = smul.addr %s138, 4
        %s140 = scalar_lea.vmem %s0, %s139
        %p141 = pneg %p34
        %p142 = pneg %p31
        %p143 = pneg %p55
        %p144 = pneg %p52
        %p145 = pneg %p81
        %p146 = pneg %p78
        %s147 = sand.u32 %s68, 1
        %s148 = sand.u32 %s68, 1
        %s149 = smul.addr %s148, 128
        %s150 = scalar_lea.vmem [#allocation2], %s149
        %s151 = smul.u32 16, %s13
        %s152 = ssub.s32 29, %s151
        %p153 = scmp.lt.s32.totalorder %s152, 16
        %s154 = scalar_select %p153, %s152, 16
        %s155 = smul.u32 64, %s154
        %s156 = smul.u32 %s155, 11
        %p157 = scmp.lt.s32.totalorder %s151, 28
        %s158 = scalar_select %p157, %s151, 28
        %s159 = smul.addr %s158, 11
        %s160 = smul.addr %s159, 4
        %s161 = scalar_lea.vmem %s0, %s160
        %s162 = smul.u32 16, %s13
        %s163 = ssub.s32 29, %s162
        %p164 = scmp.lt.s32.totalorder %s163, 16
        %s165 = scalar_select %p164, %s163, 16
        %s166 = smul.u32 64, %s165
        %s167 = smul.u32 %s166, 11
        %s168 = smul.u32 16, %s13
        %s169 = ssub.s32 29, %s168
        %p170 = scmp.lt.s32.totalorder %s169, 16
        %s171 = scalar_select %p170, %s169, 16
        %s172 = smul.u32 128, %s171
        %v174 = vld [vmem:[%s161] sm:$0xff]
        %v175 = vld [vmem:[%s161 + $0x8] sm:$0xff]
        %v176 = vld [vmem:[%s161 + $0x10] sm:$0xff]
        %v177 = vld [vmem:[%s161 + $0x18] sm:$0xff]
        %v178 = vld [vmem:[%s161 + $0x20] sm:$0xff]
        %v179 = vld [vmem:[%s161 + $0x28] sm:$0xf]
        %v180 = vld [vmem:[%s161 + $0x2c] sm:$0xff]
        %v181 = vld [vmem:[%s161 + $0x34] sm:$0xff]
        %v182 = vld [vmem:[%s161 + $0x3c] sm:$0xff]
        %v183 = vld [vmem:[%s161 + $0x44] sm:$0xff]
        %v184 = vld [vmem:[%s161 + $0x4c] sm:$0xff]
        %v185 = vld [vmem:[%s161 + $0x54] sm:$0xf]
        %v186 = vld [vmem:[%s161 + $0x58] sm:$0xff]
        %v187 = vld [vmem:[%s161 + $0x60] sm:$0xff]
        %v188 = vld [vmem:[%s161 + $0x68] sm:$0xff]
        %v189 = vld [vmem:[%s161 + $0x70] sm:$0xff]
        %v190 = vld [vmem:[%s161 + $0x78] sm:$0xff]
        %v191 = vld [vmem:[%s161 + $0x80] sm:$0xf]
        %v192 = vld [vmem:[%s161 + $0x84] sm:$0xff]
        %v193 = vld [vmem:[%s161 + $0x8c] sm:$0xff]
        %v194 = vld [vmem:[%s161 + $0x94] sm:$0xff]
        %v195 = vld [vmem:[%s161 + $0x9c] sm:$0xff]
        %v196 = vld [vmem:[%s161 + $0xa4] sm:$0xff]
        %v197 = vld [vmem:[%s161 + $0xac] sm:$0xf]
        %v198 = vld [vmem:[%s161 + $0xb0] sm:$0xff]
        %v199 = vld [vmem:[%s161 + $0xb8] sm:$0xff]
        %v200 = vld [vmem:[%s161 + $0xc0] sm:$0xff]
        %v201 = vld [vmem:[%s161 + $0xc8] sm:$0xff]
        %v202 = vld [vmem:[%s161 + $0xd0] sm:$0xff]
        %v203 = vld [vmem:[%s161 + $0xd8] sm:$0xf]
        %v204 = vld [vmem:[%s161 + $0xdc] sm:$0xff]
        %v205 = vld [vmem:[%s161 + $0xe4] sm:$0xff]
        %v206 = vld [vmem:[%s161 + $0xec] sm:$0xff]
        %v207 = vld [vmem:[%s161 + $0xf4] sm:$0xff]
        %v208 = vld [vmem:[%s161 + $0xfc] sm:$0xff]
        %v209 = vld [vmem:[%s161 + $0x104] sm:$0xf]
        %v210 = vld [vmem:[%s161 + $0x108] sm:$0xff]
        %v211 = vld [vmem:[%s161 + $0x110] sm:$0xff]
        %v212 = vld [vmem:[%s161 + $0x118] sm:$0xff]
        %v213 = vld [vmem:[%s161 + $0x120] sm:$0xff]
        %v214 = vld [vmem:[%s161 + $0x128] sm:$0xff]
        %v215 = vld [vmem:[%s161 + $0x130] sm:$0xf]
        %v216 = vld [vmem:[%s161 + $0x134] sm:$0xff]
        %v217 = vld [vmem:[%s161 + $0x13c] sm:$0xff]
        %v218 = vld [vmem:[%s161 + $0x144] sm:$0xff]
        %v219 = vld [vmem:[%s161 + $0x14c] sm:$0xff]
        %v220 = vld [vmem:[%s161 + $0x154] sm:$0xff]
        %v221 = vld [vmem:[%s161 + $0x15c] sm:$0xf]
        %v222 = vld [vmem:[%s161 + $0x160] sm:$0xff]
        %v223 = vld [vmem:[%s161 + $0x168] sm:$0xff]
        %v224 = vld [vmem:[%s161 + $0x170] sm:$0xff]
        %v225 = vld [vmem:[%s161 + $0x178] sm:$0xff]
        %v226 = vld [vmem:[%s161 + $0x180] sm:$0xff]
        %v227 = vld [vmem:[%s161 + $0x188] sm:$0xf]
        %v228 = vld [vmem:[%s161 + $0x18c] sm:$0xff]
        %v229 = vld [vmem:[%s161 + $0x194] sm:$0xff]
        %v230 = vld [vmem:[%s161 + $0x19c] sm:$0xff]
        %v231 = vld [vmem:[%s161 + $0x1a4] sm:$0xff]
        %v232 = vld [vmem:[%s161 + $0x1ac] sm:$0xff]
        %v233 = vld [vmem:[%s161 + $0x1b4] sm:$0xf]
        %v234 = vld [vmem:[%s161 + $0x1b8] sm:$0xff]
        %v235 = vld [vmem:[%s161 + $0x1c0] sm:$0xff]
        %v236 = vld [vmem:[%s161 + $0x1c8] sm:$0xff]
        %v237 = vld [vmem:[%s161 + $0x1d0] sm:$0xff]
        %v238 = vld [vmem:[%s161 + $0x1d8] sm:$0xff]
        %v239 = vld [vmem:[%s161 + $0x1e0] sm:$0xf]
        %v240 = vld [vmem:[%s161 + $0x1e4] sm:$0xff]
        %v241 = vld [vmem:[%s161 + $0x1ec] sm:$0xff]
        %v242 = vld [vmem:[%s161 + $0x1f4] sm:$0xff]
        %v243 = vld [vmem:[%s161 + $0x1fc] sm:$0xff]
        %v244 = vld [vmem:[%s161 + $0x204] sm:$0xff]
        %v245 = vld [vmem:[%s161 + $0x20c] sm:$0xf]
        %v246 = vld [vmem:[%s161 + $0x210] sm:$0xff]
        %v247 = vld [vmem:[%s161 + $0x218] sm:$0xff]
        %v248 = vld [vmem:[%s161 + $0x220] sm:$0xff]
        %v249 = vld [vmem:[%s161 + $0x228] sm:$0xff]
        %v250 = vld [vmem:[%s161 + $0x230] sm:$0xff]
        %v251 = vld [vmem:[%s161 + $0x238] sm:$0xf]
        %v252 = vld [vmem:[%s161 + $0x23c] sm:$0xff]
        %v253 = vld [vmem:[%s161 + $0x244] sm:$0xff]
        %v254 = vld [vmem:[%s161 + $0x24c] sm:$0xff]
        %v255 = vld [vmem:[%s161 + $0x254] sm:$0xff]
        %v256 = vld [vmem:[%s161 + $0x25c] sm:$0xff]
        %v257 = vld [vmem:[%s161 + $0x264] sm:$0xf]
        %v258 = vld [vmem:[%s161 + $0x268] sm:$0xff]
        %v259 = vld [vmem:[%s161 + $0x270] sm:$0xff]
        %v260 = vld [vmem:[%s161 + $0x278] sm:$0xff]
        %v261 = vld [vmem:[%s161 + $0x280] sm:$0xff]
        %v262 = vld [vmem:[%s161 + $0x288] sm:$0xff]
        %v263 = vld [vmem:[%s161 + $0x290] sm:$0xf]
        %v264 = vld [vmem:[%s161 + $0x294] sm:$0xff]
        %v265 = vld [vmem:[%s161 + $0x29c] sm:$0xff]
        %v266 = vld [vmem:[%s161 + $0x2a4] sm:$0xff]
        %v267 = vld [vmem:[%s161 + $0x2ac] sm:$0xff]
        %v268 = vld [vmem:[%s161 + $0x2b4] sm:$0xff]
        %v269 = vld [vmem:[%s161 + $0x2bc] sm:$0xf]
        %v270 = vld [vmem:[%s1] sm:$0xff]
        %v271 = vld [vmem:[%s1 + $0x8] sm:$0xff]
        %v272 = vld [vmem:[%s1 + $0x10] sm:$0xff]
        %v273 = vld [vmem:[%s1 + $0x18] sm:$0xff]
        %v274 = vld [vmem:[%s1 + $0x20] sm:$0xff]
        %v275 = vld [vmem:[%s1 + $0x28] sm:$0xff]
        %v276 = vld [vmem:[%s1 + $0x30] sm:$0xff]
        %v277 = vld [vmem:[%s1 + $0x38] sm:$0xff]
        %v278 = vld [vmem:[%s1 + $0x40] sm:$0xff]
        %v279 = vld [vmem:[%s1 + $0x48] sm:$0xff]
        %v280 = vld [vmem:[%s1 + $0x50] sm:$0xff]
        %v281 = vld [vmem:[%s1 + $0x58] sm:$0xff]
        %v282 = vld [vmem:[%s1 + $0x60] sm:$0xff]
        %v283 = vld [vmem:[%s1 + $0x68] sm:$0xff]
        %v284 = vld [vmem:[%s1 + $0x70] sm:$0xff]
        %v285 = vld [vmem:[%s1 + $0x78] sm:$0xff]
        %v286 = vld [vmem:[%s1 + $0x80] sm:$0xff]
        %v287 = vld [vmem:[%s1 + $0x88] sm:$0xff]
        %v288 = vld [vmem:[%s1 + $0x90] sm:$0xff]
        %v289 = vld [vmem:[%s1 + $0x98] sm:$0xff]
        %v290 = vld [vmem:[%s1 + $0xa0] sm:$0xff]
        %v291 = vld [vmem:[%s1 + $0xa8] sm:$0xff]
        %v292 = vld [vmem:[%s1 + $0xb0] sm:$0xff]
        %v293 = vld [vmem:[%s1 + $0xb8] sm:$0xff]
        %v294 = vld [vmem:[%s1 + $0xc0] sm:$0xff]
        %v295 = vld [vmem:[%s1 + $0xc8] sm:$0xff]
        %v296 = vld [vmem:[%s1 + $0xd0] sm:$0xff]
        %v297 = vld [vmem:[%s1 + $0xd8] sm:$0xff]
        %v298 = vld [vmem:[%s1 + $0xe0] sm:$0xff]
        %v299 = vld [vmem:[%s1 + $0xe8] sm:$0xff]
        %v300 = vld [vmem:[%s1 + $0xf0] sm:$0xff]
        %v301 = vld [vmem:[%s1 + $0xf8] sm:$0xff]
        %v302 = vld [vmem:[%s1 + $0x100] sm:$0xff]
        %v303 = vld [vmem:[%s1 + $0x108] sm:$0xff]
        %v304 = vld [vmem:[%s1 + $0x110] sm:$0xff]
        %v305 = vld [vmem:[%s1 + $0x118] sm:$0xff]
        %v306 = vld [vmem:[%s1 + $0x120] sm:$0xff]
        %v307 = vld [vmem:[%s1 + $0x128] sm:$0xff]
        %v308 = vld [vmem:[%s1 + $0x130] sm:$0xff]
        %v309 = vld [vmem:[%s1 + $0x138] sm:$0xff]
        %v310 = vld [vmem:[%s1 + $0x140] sm:$0xff]
        %v311 = vld [vmem:[%s1 + $0x148] sm:$0xff]
        %v312 = vld [vmem:[%s1 + $0x150] sm:$0xff]
        %v313 = vld [vmem:[%s1 + $0x158] sm:$0xff]
        %v314 = vld [vmem:[%s1 + $0x160] sm:$0xff]
        %v315 = vld [vmem:[%s1 + $0x168] sm:$0xff]
        %v316 = vld [vmem:[%s1 + $0x170] sm:$0xff]
        %v317 = vld [vmem:[%s1 + $0x178] sm:$0xff]
        %v318 = vld [vmem:[%s1 + $0x180] sm:$0xff]
        %v319 = vld [vmem:[%s1 + $0x188] sm:$0xff]
        %v320 = vld [vmem:[%s1 + $0x190] sm:$0xff]
        %v321 = vld [vmem:[%s1 + $0x198] sm:$0xff]
        %v322 = vld [vmem:[%s1 + $0x1a0] sm:$0xff]
        %v323 = vld [vmem:[%s1 + $0x1a8] sm:$0xff]
        %v324 = vld [vmem:[%s1 + $0x1b0] sm:$0xff]
        %v325 = vld [vmem:[%s1 + $0x1b8] sm:$0xff]
        %v326 = vld [vmem:[%s1 + $0x1c0] sm:$0xff]
        %v327 = vld [vmem:[%s1 + $0x1c8] sm:$0xff]
        %v328 = vld [vmem:[%s1 + $0x1d0] sm:$0xff]
        %v329 = vld [vmem:[%s1 + $0x1d8] sm:$0xff]
        %v330 = vld [vmem:[%s1 + $0x1e0] sm:$0xff]
        %v331 = vld [vmem:[%s1 + $0x1e8] sm:$0xff]
        %v332 = vld [vmem:[%s1 + $0x1f0] sm:$0xff]
        %v333 = vld [vmem:[%s1 + $0x1f8] sm:$0xff]
        %v334 = vld [vmem:[%s1 + $0x200] sm:$0xff]
        %v335 = vld [vmem:[%s1 + $0x208] sm:$0xff]
        %v336 = vld [vmem:[%s1 + $0x210] sm:$0xff]
        %v337 = vld [vmem:[%s1 + $0x218] sm:$0xff]
        %v338 = vld [vmem:[%s1 + $0x220] sm:$0xff]
        %v339 = vld [vmem:[%s1 + $0x228] sm:$0xff]
        %v340 = vld [vmem:[%s1 + $0x230] sm:$0xff]
        %v341 = vld [vmem:[%s1 + $0x238] sm:$0xff]
        %v342 = vld [vmem:[%s1 + $0x240] sm:$0xff]
        %v343 = vld [vmem:[%s1 + $0x248] sm:$0xff]
        %v344 = vld [vmem:[%s1 + $0x250] sm:$0xff]
        %v345 = vld [vmem:[%s1 + $0x258] sm:$0xff]
        %v346 = vld [vmem:[%s1 + $0x260] sm:$0xff]
        %v347 = vld [vmem:[%s1 + $0x268] sm:$0xff]
        %v348 = vld [vmem:[%s1 + $0x270] sm:$0xff]
        %v349 = vld [vmem:[%s1 + $0x278] sm:$0xff]
        %v350 = vld [vmem:[%s1 + $0x280] sm:$0xff]
        %v351 = vld [vmem:[%s1 + $0x288] sm:$0xff]
        %v352 = vld [vmem:[%s1 + $0x290] sm:$0xff]
        %v353 = vld [vmem:[%s1 + $0x298] sm:$0xff]
        %v354 = vld [vmem:[%s1 + $0x2a0] sm:$0xff]
        %v355 = vld [vmem:[%s1 + $0x2a8] sm:$0xff]
        %v356 = vld [vmem:[%s1 + $0x2b0] sm:$0xff]
        %v357 = vld [vmem:[%s1 + $0x2b8] sm:$0xff]
        %v358 = vld [vmem:[%s1 + $0x2c0] sm:$0xff]
        %v359 = vld [vmem:[%s1 + $0x2c8] sm:$0xff]
        %v360 = vld [vmem:[%s1 + $0x2d0] sm:$0xff]
        %v361 = vld [vmem:[%s1 + $0x2d8] sm:$0xff]
        %v362 = vld [vmem:[%s1 + $0x2e0] sm:$0xff]
        %v363 = vld [vmem:[%s1 + $0x2e8] sm:$0xff]
        %v364 = vld [vmem:[%s1 + $0x2f0] sm:$0xff]
        %v365 = vld [vmem:[%s1 + $0x2f8] sm:$0xff]
        %v366 = vld [vmem:[%s1 + $0x300] sm:$0xff]
        %v367 = vld [vmem:[%s1 + $0x308] sm:$0xff]
        %v368 = vld [vmem:[%s1 + $0x310] sm:$0xff]
        %v369 = vld [vmem:[%s1 + $0x318] sm:$0xff]
        %v370 = vld [vmem:[%s1 + $0x320] sm:$0xff]
        %v371 = vld [vmem:[%s1 + $0x328] sm:$0xff]
        %v372 = vld [vmem:[%s1 + $0x330] sm:$0xff]
        %v373 = vld [vmem:[%s1 + $0x338] sm:$0xff]
        %v374 = vld [vmem:[%s1 + $0x340] sm:$0xff]
        %v375 = vld [vmem:[%s1 + $0x348] sm:$0xff]
        %v376 = vld [vmem:[%s1 + $0x350] sm:$0xff]
        %v377 = vld [vmem:[%s1 + $0x358] sm:$0xff]
        %v378 = vld [vmem:[%s1 + $0x360] sm:$0xff]
        %v379 = vld [vmem:[%s1 + $0x368] sm:$0xff]
        %v380 = vld [vmem:[%s1 + $0x370] sm:$0xff]
        %v381 = vld [vmem:[%s1 + $0x378] sm:$0xff]
        %v382 = vld [vmem:[%s1 + $0x380] sm:$0xff]
        %v383 = vld [vmem:[%s1 + $0x388] sm:$0xff]
        %v384 = vld [vmem:[%s1 + $0x390] sm:$0xff]
        %v385 = vld [vmem:[%s1 + $0x398] sm:$0xff]
        %v386 = vld [vmem:[%s1 + $0x3a0] sm:$0xff]
        %v387 = vld [vmem:[%s1 + $0x3a8] sm:$0xff]
        %v388 = vld [vmem:[%s1 + $0x3b0] sm:$0xff]
        %v389 = vld [vmem:[%s1 + $0x3b8] sm:$0xff]
        %v390 = vld [vmem:[%s1 + $0x3c0] sm:$0xff]
        %v391 = vld [vmem:[%s1 + $0x3c8] sm:$0xff]
        %v392 = vld [vmem:[%s1 + $0x3d0] sm:$0xff]
        %v393 = vld [vmem:[%s1 + $0x3d8] sm:$0xff]
        %v394 = vld [vmem:[%s1 + $0x3e0] sm:$0xff]
        %v395 = vld [vmem:[%s1 + $0x3e8] sm:$0xff]
        %v396 = vld [vmem:[%s1 + $0x3f0] sm:$0xff]
        %v397 = vld [vmem:[%s1 + $0x3f8] sm:$0xff]
        %v398 = vld [vmem:[%s1 + $0x400] sm:$0xff]
        %v399 = vld [vmem:[%s1 + $0x408] sm:$0xff]
        %v400 = vld [vmem:[%s1 + $0x410] sm:$0xff]
        %v401 = vld [vmem:[%s1 + $0x418] sm:$0xff]
        %v402 = vld [vmem:[%s1 + $0x420] sm:$0xff]
        %v403 = vld [vmem:[%s1 + $0x428] sm:$0xff]
        %v404 = vld [vmem:[%s1 + $0x430] sm:$0xff]
        %v405 = vld [vmem:[%s1 + $0x438] sm:$0xff]
        %v406 = vld [vmem:[%s1 + $0x440] sm:$0xff]
        %v407 = vld [vmem:[%s1 + $0x448] sm:$0xff]
        %v408 = vld [vmem:[%s1 + $0x450] sm:$0xff]
        %v409 = vld [vmem:[%s1 + $0x458] sm:$0xff]
        %v410 = vld [vmem:[%s1 + $0x460] sm:$0xff]
        %v411 = vld [vmem:[%s1 + $0x468] sm:$0xff]
        %v412 = vld [vmem:[%s1 + $0x470] sm:$0xff]
        %v413 = vld [vmem:[%s1 + $0x478] sm:$0xff]
        %v414 = vld [vmem:[%s1 + $0x480] sm:$0xff]
        %v415 = vld [vmem:[%s1 + $0x488] sm:$0xff]
        %v416 = vld [vmem:[%s1 + $0x490] sm:$0xff]
        %v417 = vld [vmem:[%s1 + $0x498] sm:$0xff]
        %v418 = vld [vmem:[%s1 + $0x4a0] sm:$0xff]
        %v419 = vld [vmem:[%s1 + $0x4a8] sm:$0xff]
        %v420 = vld [vmem:[%s1 + $0x4b0] sm:$0xff]
        %v421 = vld [vmem:[%s1 + $0x4b8] sm:$0xff]
        %v422 = vld [vmem:[%s1 + $0x4c0] sm:$0xff]
        %v423 = vld [vmem:[%s1 + $0x4c8] sm:$0xff]
        %v424 = vld [vmem:[%s1 + $0x4d0] sm:$0xff]
        %v425 = vld [vmem:[%s1 + $0x4d8] sm:$0xff]
        %v426 = vld [vmem:[%s1 + $0x4e0] sm:$0xff]
        %v427 = vld [vmem:[%s1 + $0x4e8] sm:$0xff]
        %v428 = vld [vmem:[%s1 + $0x4f0] sm:$0xff]
        %v429 = vld [vmem:[%s1 + $0x4f8] sm:$0xff]
        %v430 = vld [vmem:[%s1 + $0x500] sm:$0xff]
        %v431 = vld [vmem:[%s1 + $0x508] sm:$0xff]
        %v432 = vld [vmem:[%s1 + $0x510] sm:$0xff]
        %v433 = vld [vmem:[%s1 + $0x518] sm:$0xff]
        %v434 = vld [vmem:[%s1 + $0x520] sm:$0xff]
        %v435 = vld [vmem:[%s1 + $0x528] sm:$0xff]
        %v436 = vld [vmem:[%s1 + $0x530] sm:$0xff]
        %v437 = vld [vmem:[%s1 + $0x538] sm:$0xff]
        %v438 = vld [vmem:[%s1 + $0x540] sm:$0xff]
        %v439 = vld [vmem:[%s1 + $0x548] sm:$0xff]
        %v440 = vld [vmem:[%s1 + $0x550] sm:$0xff]
        %v441 = vld [vmem:[%s1 + $0x558] sm:$0xff]
        %v442 = vld [vmem:[%s1 + $0x560] sm:$0xff]
        %v443 = vld [vmem:[%s1 + $0x568] sm:$0xff]
        %v444 = vpack.c.bf16 %v271, %v270
        %v445 = vpack.c.bf16 %v273, %v272
        %v446 = vpack.c.bf16 %v275, %v274
        %v447 = vpack.c.bf16 %v277, %v276
        %v448 = vpack.c.bf16 %v279, %v278
        %v449 = vpack.c.bf16 %v281, %v280
        %v450 = vpack.c.bf16 %v283, %v282
        %v451 = vpack.c.bf16 %v285, %v284
        %v452 = vpack.c.bf16 %v287, %v286
        %v453 = vpack.c.bf16 %v289, %v288
        %v454 = vpack.c.bf16 %v291, %v290
        %v455 = vpack.c.bf16 %v293, %v292
        %v456 = vpack.c.bf16 %v295, %v294
        %v457 = vpack.c.bf16 %v297, %v296
        %v458 = vpack.c.bf16 %v299, %v298
        %v459 = vpack.c.bf16 %v301, %v300
        %v460 = vpack.c.bf16 %v303, %v302
        %v461 = vpack.c.bf16 %v305, %v304
        %v462 = vpack.c.bf16 %v307, %v306
        %v463 = vpack.c.bf16 %v309, %v308
        %v464 = vpack.c.bf16 %v311, %v310
        %v465 = vpack.c.bf16 %v313, %v312
        %v466 = vpack.c.bf16 %v315, %v314
        %v467 = vpack.c.bf16 %v317, %v316
        %v468 = vpack.c.bf16 %v319, %v318
        %v469 = vpack.c.bf16 %v321, %v320
        %v470 = vpack.c.bf16 %v323, %v322
        %v471 = vpack.c.bf16 %v325, %v324
        %v472 = vpack.c.bf16 %v327, %v326
        %v473 = vpack.c.bf16 %v329, %v328
        %v474 = vpack.c.bf16 %v331, %v330
        %v475 = vpack.c.bf16 %v333, %v332
        %v476 = vpack.c.bf16 %v335, %v334
        %v477 = vpack.c.bf16 %v337, %v336
        %v478 = vpack.c.bf16 %v339, %v338
        %v479 = vpack.c.bf16 %v341, %v340
        %v480 = vpack.c.bf16 %v343, %v342
        %v481 = vpack.c.bf16 %v345, %v344
        %v482 = vpack.c.bf16 %v347, %v346
        %v483 = vpack.c.bf16 %v349, %v348
        %v484 = vpack.c.bf16 %v351, %v350
        %v485 = vpack.c.bf16 %v353, %v352
        %v486 = vpack.c.bf16 %v355, %v354
        %v487 = vpack.c.bf16 %v357, %v356
        %v488 = vpack.c.bf16 %v359, %v358
        %v489 = vpack.c.bf16 %v361, %v360
        %v490 = vpack.c.bf16 %v363, %v362
        %v491 = vpack.c.bf16 %v365, %v364
        %v492 = vpack.c.bf16 %v367, %v366
        %v493 = vpack.c.bf16 %v369, %v368
        %v494 = vpack.c.bf16 %v371, %v370
        %v495 = vpack.c.bf16 %v373, %v372
        %v496 = vpack.c.bf16 %v375, %v374
        %v497 = vpack.c.bf16 %v377, %v376
        %v498 = vpack.c.bf16 %v379, %v378
        %v499 = vpack.c.bf16 %v381, %v380
        %v500 = vpack.c.bf16 %v383, %v382
        %v501 = vpack.c.bf16 %v385, %v384
        %v502 = vpack.c.bf16 %v387, %v386
        %v503 = vpack.c.bf16 %v389, %v388
        %v504 = vpack.c.bf16 %v391, %v390
        %v505 = vpack.c.bf16 %v393, %v392
        %v506 = vpack.c.bf16 %v395, %v394
        %v507 = vpack.c.bf16 %v397, %v396
        %v508 = vpack.c.bf16 %v399, %v398
        %v509 = vpack.c.bf16 %v401, %v400
        %v510 = vpack.c.bf16 %v403, %v402
        %v511 = vpack.c.bf16 %v405, %v404
        %v512 = vpack.c.bf16 %v407, %v406
        %v513 = vpack.c.bf16 %v409, %v408
        %v514 = vpack.c.bf16 %v411, %v410
        %v515 = vpack.c.bf16 %v413, %v412
        %v516 = vpack.c.bf16 %v415, %v414
        %v517 = vpack.c.bf16 %v417, %v416
        %v518 = vpack.c.bf16 %v419, %v418
        %v519 = vpack.c.bf16 %v421, %v420
        %v520 = vpack.c.bf16 %v423, %v422
        %v521 = vpack.c.bf16 %v425, %v424
        %v522 = vpack.c.bf16 %v427, %v426
        %v523 = vpack.c.bf16 %v429, %v428
        %v524 = vpack.c.bf16 %v431, %v430
        %v525 = vpack.c.bf16 %v433, %v432
        %v526 = vpack.c.bf16 %v435, %v434
        %v527 = vpack.c.bf16 %v437, %v436
        %v528 = vpack.c.bf16 %v439, %v438
        %v529 = vpack.c.bf16 %v441, %v440
        %v530 = vpack.c.bf16 %v443, %v442
        %v627 = vunpack.c.l.b16 %v174
        %v628 = vunpack.c.h.b16 %v174
        %v629 = vunpack.c.l.b16 %v175
        %v630 = vunpack.c.h.b16 %v175
        %v631 = vunpack.c.l.b16 %v176
        %v632 = vunpack.c.h.b16 %v176
        %v633 = vunpack.c.l.b16 %v177
        %v634 = vunpack.c.h.b16 %v177
        %v635 = vunpack.c.l.b16 %v178
        %v636 = vunpack.c.h.b16 %v178
        %v637 = vunpack.c.l.b16 %v179
        %v638 = vunpack.c.l.b16 %v180
        %v639 = vunpack.c.h.b16 %v180
        %v640 = vunpack.c.l.b16 %v181
        %v641 = vunpack.c.h.b16 %v181
        %v642 = vunpack.c.l.b16 %v182
        %v643 = vunpack.c.h.b16 %v182
        %v644 = vunpack.c.l.b16 %v183
        %v645 = vunpack.c.h.b16 %v183
        %v646 = vunpack.c.l.b16 %v184
        %v647 = vunpack.c.h.b16 %v184
        %v648 = vunpack.c.l.b16 %v185
        %v649 = vunpack.c.l.b16 %v186
        %v650 = vunpack.c.h.b16 %v186
        %v651 = vunpack.c.l.b16 %v187
        %v652 = vunpack.c.h.b16 %v187
        %v653 = vunpack.c.l.b16 %v188
        %v654 = vunpack.c.h.b16 %v188
        %v655 = vunpack.c.l.b16 %v189
        %v656 = vunpack.c.h.b16 %v189
        %v657 = vunpack.c.l.b16 %v190
        %v658 = vunpack.c.h.b16 %v190
        %v659 = vunpack.c.l.b16 %v191
        %v660 = vunpack.c.l.b16 %v192
        %v661 = vunpack.c.h.b16 %v192
        %v662 = vunpack.c.l.b16 %v193
        %v663 = vunpack.c.h.b16 %v193
        %v664 = vunpack.c.l.b16 %v194
        %v665 = vunpack.c.h.b16 %v194
        %v666 = vunpack.c.l.b16 %v195
        %v667 = vunpack.c.h.b16 %v195
        %v668 = vunpack.c.l.b16 %v196
        %v669 = vunpack.c.h.b16 %v196
        %v670 = vunpack.c.l.b16 %v197
        %v671 = vunpack.c.l.b16 %v198
        %v672 = vunpack.c.h.b16 %v198
        %v673 = vunpack.c.l.b16 %v199
        %v674 = vunpack.c.h.b16 %v199
        %v675 = vunpack.c.l.b16 %v200
        %v676 = vunpack.c.h.b16 %v200
        %v677 = vunpack.c.l.b16 %v201
        %v678 = vunpack.c.h.b16 %v201
        %v679 = vunpack.c.l.b16 %v202
        %v680 = vunpack.c.h.b16 %v202
        %v681 = vunpack.c.l.b16 %v203
        %v682 = vunpack.c.l.b16 %v204
        %v683 = vunpack.c.h.b16 %v204
        %v684 = vunpack.c.l.b16 %v205
        %v685 = vunpack.c.h.b16 %v205
        %v686 = vunpack.c.l.b16 %v206
        %v687 = vunpack.c.h.b16 %v206
        %v688 = vunpack.c.l.b16 %v207
        %v689 = vunpack.c.h.b16 %v207
        %v690 = vunpack.c.l.b16 %v208
        %v691 = vunpack.c.h.b16 %v208
        %v692 = vunpack.c.l.b16 %v209
        %v693 = vunpack.c.l.b16 %v210
        %v694 = vunpack.c.h.b16 %v210
        %v695 = vunpack.c.l.b16 %v211
        %v696 = vunpack.c.h.b16 %v211
        %v697 = vunpack.c.l.b16 %v212
        %v698 = vunpack.c.h.b16 %v212
        %v699 = vunpack.c.l.b16 %v213
        %v700 = vunpack.c.h.b16 %v213
        %v701 = vunpack.c.l.b16 %v214
        %v702 = vunpack.c.h.b16 %v214
        %v703 = vunpack.c.l.b16 %v215
        %v704 = vunpack.c.l.b16 %v216
        %v705 = vunpack.c.h.b16 %v216
        %v706 = vunpack.c.l.b16 %v217
        %v707 = vunpack.c.h.b16 %v217
        %v708 = vunpack.c.l.b16 %v218
        %v709 = vunpack.c.h.b16 %v218
        %v710 = vunpack.c.l.b16 %v219
        %v711 = vunpack.c.h.b16 %v219
        %v712 = vunpack.c.l.b16 %v220
        %v713 = vunpack.c.h.b16 %v220
        %v714 = vunpack.c.l.b16 %v221
        %v715 = vunpack.c.l.b16 %v222
        %v716 = vunpack.c.h.b16 %v222
        %v717 = vunpack.c.l.b16 %v223
        %v718 = vunpack.c.h.b16 %v223
        %v719 = vunpack.c.l.b16 %v224
        %v720 = vunpack.c.h.b16 %v224
        %v721 = vunpack.c.l.b16 %v225
        %v722 = vunpack.c.h.b16 %v225
        %v723 = vunpack.c.l.b16 %v226
        %v724 = vunpack.c.h.b16 %v226
        %v725 = vunpack.c.l.b16 %v227
        %v726 = vunpack.c.l.b16 %v228
        %v727 = vunpack.c.h.b16 %v228
        %v728 = vunpack.c.l.b16 %v229
        %v729 = vunpack.c.h.b16 %v229
        %v730 = vunpack.c.l.b16 %v230
        %v731 = vunpack.c.h.b16 %v230
        %v732 = vunpack.c.l.b16 %v231
        %v733 = vunpack.c.h.b16 %v231
        %v734 = vunpack.c.l.b16 %v232
        %v735 = vunpack.c.h.b16 %v232
        %v736 = vunpack.c.l.b16 %v233
        %v737 = vunpack.c.l.b16 %v234
        %v738 = vunpack.c.h.b16 %v234
        %v739 = vunpack.c.l.b16 %v235
        %v740 = vunpack.c.h.b16 %v235
        %v741 = vunpack.c.l.b16 %v236
        %v742 = vunpack.c.h.b16 %v236
        %v743 = vunpack.c.l.b16 %v237
        %v744 = vunpack.c.h.b16 %v237
        %v745 = vunpack.c.l.b16 %v238
        %v746 = vunpack.c.h.b16 %v238
        %v747 = vunpack.c.l.b16 %v239
        %v748 = vunpack.c.l.b16 %v240
        %v749 = vunpack.c.h.b16 %v240
        %v750 = vunpack.c.l.b16 %v241
        %v751 = vunpack.c.h.b16 %v241
        %v752 = vunpack.c.l.b16 %v242
        %v753 = vunpack.c.h.b16 %v242
        %v754 = vunpack.c.l.b16 %v243
        %v755 = vunpack.c.h.b16 %v243
        %v756 = vunpack.c.l.b16 %v244
        %v757 = vunpack.c.h.b16 %v244
        %v758 = vunpack.c.l.b16 %v245
        %v759 = vunpack.c.l.b16 %v246
        %v760 = vunpack.c.h.b16 %v246
        %v761 = vunpack.c.l.b16 %v247
        %v762 = vunpack.c.h.b16 %v247
        %v763 = vunpack.c.l.b16 %v248
        %v764 = vunpack.c.h.b16 %v248
        %v765 = vunpack.c.l.b16 %v249
        %v766 = vunpack.c.h.b16 %v249
        %v767 = vunpack.c.l.b16 %v250
        %v768 = vunpack.c.h.b16 %v250
        %v769 = vunpack.c.l.b16 %v251
        %v770 = vunpack.c.l.b16 %v252
        %v771 = vunpack.c.h.b16 %v252
        %v772 = vunpack.c.l.b16 %v253
        %v773 = vunpack.c.h.b16 %v253
        %v774 = vunpack.c.l.b16 %v254
        %v775 = vunpack.c.h.b16 %v254
        %v776 = vunpack.c.l.b16 %v255
        %v777 = vunpack.c.h.b16 %v255
        %v778 = vunpack.c.l.b16 %v256
        %v779 = vunpack.c.h.b16 %v256
        %v780 = vunpack.c.l.b16 %v257
        %v781 = vunpack.c.l.b16 %v258
        %v782 = vunpack.c.h.b16 %v258
        %v783 = vunpack.c.l.b16 %v259
        %v784 = vunpack.c.h.b16 %v259
        %v785 = vunpack.c.l.b16 %v260
        %v786 = vunpack.c.h.b16 %v260
        %v787 = vunpack.c.l.b16 %v261
        %v788 = vunpack.c.h.b16 %v261
        %v789 = vunpack.c.l.b16 %v262
        %v790 = vunpack.c.h.b16 %v262
        %v791 = vunpack.c.l.b16 %v263
        %v792 = vunpack.c.l.b16 %v264
        %v793 = vunpack.c.h.b16 %v264
        %v794 = vunpack.c.l.b16 %v265
        %v795 = vunpack.c.h.b16 %v265
        %v796 = vunpack.c.l.b16 %v266
        %v797 = vunpack.c.h.b16 %v266
        %v798 = vunpack.c.l.b16 %v267
        %v799 = vunpack.c.h.b16 %v267
        %v800 = vunpack.c.l.b16 %v268
        %v801 = vunpack.c.h.b16 %v268
        %v802 = vunpack.c.l.b16 %v269
        %v803 = vpack.c.b16 %v638, %v627
        %v804 = vpack.c.b16 %v639, %v628
        %v805 = vpack.c.b16 %v640, %v629
        %v806 = vpack.c.b16 %v641, %v630
        %v807 = vpack.c.b16 %v642, %v631
        %v808 = vpack.c.b16 %v643, %v632
        %v809 = vpack.c.b16 %v644, %v633
        %v810 = vpack.c.b16 %v645, %v634
        %v811 = vpack.c.b16 %v646, %v635
        %v812 = vpack.c.b16 %v647, %v636
        %v813 = vpack.c.b16 %v648, %v637
        %v814 = vpack.c.b16 %v660, %v649
        %v815 = vpack.c.b16 %v661, %v650
        %v816 = vpack.c.b16 %v662, %v651
        %v817 = vpack.c.b16 %v663, %v652
        %v818 = vpack.c.b16 %v664, %v653
        %v819 = vpack.c.b16 %v665, %v654
        %v820 = vpack.c.b16 %v666, %v655
        %v821 = vpack.c.b16 %v667, %v656
        %v822 = vpack.c.b16 %v668, %v657
        %v823 = vpack.c.b16 %v669, %v658
        %v824 = vpack.c.b16 %v670, %v659
        %v825 = vpack.c.b16 %v682, %v671
        %v826 = vpack.c.b16 %v683, %v672
        %v827 = vpack.c.b16 %v684, %v673
        %v828 = vpack.c.b16 %v685, %v674
        %v829 = vpack.c.b16 %v686, %v675
        %v830 = vpack.c.b16 %v687, %v676
        %v831 = vpack.c.b16 %v688, %v677
        %v832 = vpack.c.b16 %v689, %v678
        %v833 = vpack.c.b16 %v690, %v679
        %v834 = vpack.c.b16 %v691, %v680
        %v835 = vpack.c.b16 %v692, %v681
        %v836 = vpack.c.b16 %v704, %v693
        %v837 = vpack.c.b16 %v705, %v694
        %v838 = vpack.c.b16 %v706, %v695
        %v839 = vpack.c.b16 %v707, %v696
        %v840 = vpack.c.b16 %v708, %v697
        %v841 = vpack.c.b16 %v709, %v698
        %v842 = vpack.c.b16 %v710, %v699
        %v843 = vpack.c.b16 %v711, %v700
        %v844 = vpack.c.b16 %v712, %v701
        %v845 = vpack.c.b16 %v713, %v702
        %v846 = vpack.c.b16 %v714, %v703
        %v847 = vpack.c.b16 %v726, %v715
        %v848 = vpack.c.b16 %v727, %v716
        %v849 = vpack.c.b16 %v728, %v717
        %v850 = vpack.c.b16 %v729, %v718
        %v851 = vpack.c.b16 %v730, %v719
        %v852 = vpack.c.b16 %v731, %v720
        %v853 = vpack.c.b16 %v732, %v721
        %v854 = vpack.c.b16 %v733, %v722
        %v855 = vpack.c.b16 %v734, %v723
        %v856 = vpack.c.b16 %v735, %v724
        %v857 = vpack.c.b16 %v736, %v725
        %v858 = vpack.c.b16 %v748, %v737
        %v859 = vpack.c.b16 %v749, %v738
        %v860 = vpack.c.b16 %v750, %v739
        %v861 = vpack.c.b16 %v751, %v740
        %v862 = vpack.c.b16 %v752, %v741
        %v863 = vpack.c.b16 %v753, %v742
        %v864 = vpack.c.b16 %v754, %v743
        %v865 = vpack.c.b16 %v755, %v744
        %v866 = vpack.c.b16 %v756, %v745
        %v867 = vpack.c.b16 %v757, %v746
        %v868 = vpack.c.b16 %v758, %v747
        %v869 = vpack.c.b16 %v770, %v759
        %v870 = vpack.c.b16 %v771, %v760
        %v871 = vpack.c.b16 %v772, %v761
        %v872 = vpack.c.b16 %v773, %v762
        %v873 = vpack.c.b16 %v774, %v763
        %v874 = vpack.c.b16 %v775, %v764
        %v875 = vpack.c.b16 %v776, %v765
        %v876 = vpack.c.b16 %v777, %v766
        %v877 = vpack.c.b16 %v778, %v767
        %v878 = vpack.c.b16 %v779, %v768
        %v879 = vpack.c.b16 %v780, %v769
        %v880 = vpack.c.b16 %v792, %v781
        %v881 = vpack.c.b16 %v793, %v782
        %v882 = vpack.c.b16 %v794, %v783
        %v883 = vpack.c.b16 %v795, %v784
        %v884 = vpack.c.b16 %v796, %v785
        %v885 = vpack.c.b16 %v797, %v786
        %v886 = vpack.c.b16 %v798, %v787
        %v887 = vpack.c.b16 %v799, %v788
        %v888 = vpack.c.b16 %v800, %v789
        %v889 = vpack.c.b16 %v801, %v790
        %v890 = vpack.c.b16 %v802, %v791
        %vm971 = vcmask 916480
        %v973 = vsel %vm971, %v813, 0
        %v976 = vsel %vm971, %v824, 0
        %v979 = vsel %vm971, %v835, 0
        %v982 = vsel %vm971, %v846, 0
        %v985 = vsel %vm971, %v857, 0
        %v988 = vsel %vm971, %v868, 0
        %v991 = vsel %vm971, %v879, 0
        %v994 = vsel %vm971, %v890, 0
        %996 = vmatprep.subr.bf16.mxu0 0
        %997 = vmatpush1.bf16.msra.mxu0 %v444
        %998 = vmatprep.subr.bf16.mxu0 0
        %999 = vmatpush1.bf16.msra.mxu0 %v445
        %1000 = vmatprep.subr.bf16.mxu0 0
        %1001 = vmatpush1.bf16.msra.mxu0 %v446
        %1002 = vmatprep.subr.bf16.mxu0 0
        %1003 = vmatpush1.bf16.msra.mxu0 %v447
        %1004 = vmatprep.subr.bf16.mxu0 0
        %1005 = vmatpush1.bf16.msra.mxu0 %v448
        %1006 = vmatprep.subr.bf16.mxu0 0
        %1007 = vmatpush1.bf16.msra.mxu0 %v449
        %1008 = vmatprep.subr.bf16.mxu0 0
        %1009 = vmatpush1.bf16.msra.mxu0 %v450
        %1010 = vmatprep.subr.bf16.mxu0 0
        %1011 = vmatpush1.bf16.msra.mxu0 %v451
        %1012 = vmatprep.subr.bf16.mxu0 0
        %1013 = vmatpush1.bf16.msra.mxu0 %v452
        %1014 = vmatprep.subr.bf16.mxu0 0
        %1015 = vmatpush1.bf16.msra.mxu0 %v453
        %1016 = vmatprep.subr.bf16.mxu0 0
        %1017 = vmatpush1.bf16.msra.mxu0 %v454
        %1018 = vmatprep.subr.bf16.mxu0 0
        %1019 = vmatpush1.bf16.msra.mxu0 %v455
        %1020 = vmatprep.subr.bf16.mxu0 0
        %1021 = vmatpush1.bf16.msra.mxu0 %v456
        %1022 = vmatprep.subr.bf16.mxu0 0
        %1023 = vmatpush1.bf16.msra.mxu0 %v457
        %1024 = vmatprep.subr.bf16.mxu0 0
        %1025 = vmatpush1.bf16.msra.mxu0 %v458
        %1026 = vmatprep.subr.bf16.mxu0 0
        %1027 = vmatpush1.bf16.msra.mxu0 %v459
        %1028 = vmatprep.mubr.bf16.mxu0 %v804
        %1029 = vmatmul.mubr.bf16.gmra.mrb[0].mxu0 %v803
        %v1030 = vpop.f32.mrb[0].mxu0
        %v1031 = vadd.f32 0.0, %v1030
        %v1032 = vpop.f32.mrb[0].mxu0
        %v1033 = vpop.f32.mrb[0].mxu0
        %v1034 = vadd.f32 0.0, %v1033
        %v1035 = vpop.f32.mrb[0].mxu0
        %1036 = vmatprep.mubr.bf16.mxu0 %v815
        %1037 = vmatmul.mubr.bf16.gmra.mrb[0].mxu0 %v814
        %v1038 = vpop.f32.mrb[0].mxu0
        %v1039 = vadd.f32 0.0, %v1038
        %v1040 = vpop.f32.mrb[0].mxu0
        %v1041 = vpop.f32.mrb[0].mxu0
        %v1042 = vadd.f32 0.0, %v1041
        %v1043 = vpop.f32.mrb[0].mxu0
        %1044 = vmatprep.mubr.bf16.mxu0 %v826
        %1045 = vmatmul.mubr.bf16.gmra.mrb[0].mxu0 %v825
        %v1046 = vpop.f32.mrb[0].mxu0
        %v1047 = vadd.f32 0.0, %v1046
        %v1048 = vpop.f32.mrb[0].mxu0
        %v1049 = vpop.f32.mrb[0].mxu0
        %v1050 = vadd.f32 0.0, %v1049
        %v1051 = vpop.f32.mrb[0].mxu0
        %1052 = vmatprep.mubr.bf16.mxu0 %v837
        %1053 = vmatmul.mubr.bf16.gmra.mrb[0].mxu0 %v836
        %v1054 = vpop.f32.mrb[0].mxu0
        %v1055 = vadd.f32 0.0, %v1054
        %v1056 = vpop.f32.mrb[0].mxu0
        %v1057 = vpop.f32.mrb[0].mxu0
        %v1058 = vadd.f32 0.0, %v1057
        %v1059 = vpop.f32.mrb[0].mxu0
        %1060 = vmatprep.mubr.bf16.mxu0 %v848
        %1061 = vmatmul.mubr.bf16.gmra.mrb[0].mxu0 %v847
        %v1062 = vpop.f32.mrb[0].mxu0
        %v1063 = vadd.f32 0.0, %v1062
        %v1064 = vpop.f32.mrb[0].mxu0
        %v1065 = vpop.f32.mrb[0].mxu0
        %v1066 = vadd.f32 0.0, %v1065
        %v1067 = vpop.f32.mrb[0].mxu0
        %1068 = vmatprep.mubr.bf16.mxu0 %v859
        %1069 = vmatmul.mubr.bf16.gmra.mrb[0].mxu0 %v858
        %v1070 = vpop.f32.mrb[0].mxu0
        %v1071 = vadd.f32 0.0, %v1070
        %v1072 = vpop.f32.mrb[0].mxu0
        %v1073 = vpop.f32.mrb[0].mxu0
        %v1074 = vadd.f32 0.0, %v1073
        %v1075 = vpop.f32.mrb[0].mxu0
        %1076 = vmatprep.mubr.bf16.mxu0 %v870
        %1077 = vmatmul.mubr.bf16.gmra.mrb[0].mxu0 %v869
        %v1078 = vpop.f32.mrb[0].mxu0
        %v1079 = vadd.f32 0.0, %v1078
        %v1080 = vpop.f32.mrb[0].mxu0
        %v1081 = vpop.f32.mrb[0].mxu0
        %v1082 = vadd.f32 0.0, %v1081
        %v1083 = vpop.f32.mrb[0].mxu0
        %1084 = vmatprep.mubr.bf16.mxu0 %v881
        %1085 = vmatmul.mubr.bf16.gmra.mrb[0].mxu0 %v880
        %v1086 = vpop.f32.mrb[0].mxu0
        %v1087 = vadd.f32 0.0, %v1086
        %v1088 = vpop.f32.mrb[0].mxu0
        %v1089 = vpop.f32.mrb[0].mxu0
        %v1090 = vadd.f32 0.0, %v1089
        %v1091 = vpop.f32.mrb[0].mxu0
        %1092 = vdwg.mxu0
        %1093 = vmatprep.subr.bf16.mxu0 0
        %1094 = vmatpush1.bf16.msra.mxu0 %v460
        %1095 = vmatprep.subr.bf16.mxu0 0
        %1096 = vmatpush1.bf16.msra.mxu0 %v461
        %1097 = vmatprep.subr.bf16.mxu0 0
        %1098 = vmatpush1.bf16.msra.mxu0 %v462
        %1099 = vmatprep.subr.bf16.mxu0 0
        %1100 = vmatpush1.bf16.msra.mxu0 %v463
        %1101 = vmatprep.subr.bf16.mxu0 0
        %1102 = vmatpush1.bf16.msra.mxu0 %v464
        %1103 = vmatprep.subr.bf16.mxu0 0
        %1104 = vmatpush1.bf16.msra.mxu0 %v465
        %1105 = vmatprep.subr.bf16.mxu0 0
        %1106 = vmatpush1.bf16.msra.mxu0 %v466
        %1107 = vmatprep.subr.bf16.mxu0 0
        %1108 = vmatpush1.bf16.msra.mxu0 %v467
        %1109 = vmatprep.subr.bf16.mxu0 0
        %1110 = vmatpush1.bf16.msra.mxu0 %v468
        %1111 = vmatprep.subr.bf16.mxu0 0
        %1112 = vmatpush1.bf16.msra.mxu0 %v469
        %1113 = vmatprep.subr.bf16.mxu0 0
        %1114 = vmatpush1.bf16.msra.mxu0 %v470
        %1115 = vmatprep.subr.bf16.mxu0 0
        %1116 = vmatpush1.bf16.msra.mxu0 %v471
        %1117 = vmatprep.subr.bf16.mxu0 0
        %1118 = vmatpush1.bf16.msra.mxu0 %v472
        %1119 = vmatprep.subr.bf16.mxu0 0
        %1120 = vmatpush1.bf16.msra.mxu0 %v473
        %1121 = vmatprep.subr.bf16.mxu0 0
        %1122 = vmatpush1.bf16.msra.mxu0 %v474
        %1123 = vmatprep.subr.bf16.mxu0 0
        %1124 = vmatpush1.bf16.msra.mxu0 %v475
        %1125 = vmatprep.mubr.bf16.mxu0 %v806
        %1126 = vmatmul.mubr.bf16.gmra.mrb[0].mxu0 %v805
        %v1127 = vpop.f32.mrb[0].mxu0
        %v1128 = vadd.f32 %v1031, %v1127
        %v1129 = vpop.f32.mrb[0].mxu0
        %v1130 = vpop.f32.mrb[0].mxu0
        %v1131 = vadd.f32 %v1034, %v1130
        %v1132 = vpop.f32.mrb[0].mxu0
        %1133 = vmatprep.mubr.bf16.mxu0 %v817
        %1134 = vmatmul.mubr.bf16.gmra.mrb[0].mxu0 %v816
        %v1135 = vpop.f32.mrb[0].mxu0
        %v1136 = vadd.f32 %v1039, %v1135
        %v1137 = vpop.f32.mrb[0].mxu0
        %v1138 = vpop.f32.mrb[0].mxu0
        %v1139 = vadd.f32 %v1042, %v1138
        %v1140 = vpop.f32.mrb[0].mxu0
        %1141 = vmatprep.mubr.bf16.mxu0 %v828
        %1142 = vmatmul.mubr.bf16.gmra.mrb[0].mxu0 %v827
        %v1143 = vpop.f32.mrb[0].mxu0
        %v1144 = vadd.f32 %v1047, %v1143
        %v1145 = vpop.f32.mrb[0].mxu0
        %v1146 = vpop.f32.mrb[0].mxu0
        %v1147 = vadd.f32 %v1050, %v1146
        %v1148 = vpop.f32.mrb[0].mxu0
        %1149 = vmatprep.mubr.bf16.mxu0 %v839
        %1150 = vmatmul.mubr.bf16.gmra.mrb[0].mxu0 %v838
        %v1151 = vpop.f32.mrb[0].mxu0
        %v1152 = vadd.f32 %v1055, %v1151
        %v1153 = vpop.f32.mrb[0].mxu0
        %v1154 = vpop.f32.mrb[0].mxu0
        %v1155 = vadd.f32 %v1058, %v1154
        %v1156 = vpop.f32.mrb[0].mxu0
        %1157 = vmatprep.mubr.bf16.mxu0 %v850
        %1158 = vmatmul.mubr.bf16.gmra.mrb[0].mxu0 %v849
        %v1159 = vpop.f32.mrb[0].mxu0
        %v1160 = vadd.f32 %v1063, %v1159
        %v1161 = vpop.f32.mrb[0].mxu0
        %v1162 = vpop.f32.mrb[0].mxu0
        %v1163 = vadd.f32 %v1066, %v1162
        %v1164 = vpop.f32.mrb[0].mxu0
        %1165 = vmatprep.mubr.bf16.mxu0 %v861
        %1166 = vmatmul.mubr.bf16.gmra.mrb[0].mxu0 %v860
        %v1167 = vpop.f32.mrb[0].mxu0
        %v1168 = vadd.f32 %v1071, %v1167
        %v1169 = vpop.f32.mrb[0].mxu0
        %v1170 = vpop.f32.mrb[0].mxu0
        %v1171 = vadd.f32 %v1074, %v1170
        %v1172 = vpop.f32.mrb[0].mxu0
        %1173 = vmatprep.mubr.bf16.mxu0 %v872
        %1174 = vmatmul.mubr.bf16.gmra.mrb[0].mxu0 %v871
        %v1175 = vpop.f32.mrb[0].mxu0
        %v1176 = vadd.f32 %v1079, %v1175
        %v1177 = vpop.f32.mrb[0].mxu0
        %v1178 = vpop.f32.mrb[0].mxu0
        %v1179 = vadd.f32 %v1082, %v1178
        %v1180 = vpop.f32.mrb[0].mxu0
        %1181 = vmatprep.mubr.bf16.mxu0 %v883
        %1182 = vmatmul.mubr.bf16.gmra.mrb[0].mxu0 %v882
        %v1183 = vpop.f32.mrb[0].mxu0
        %v1184 = vadd.f32 %v1087, %v1183
        %v1185 = vpop.f32.mrb[0].mxu0
        %v1186 = vpop.f32.mrb[0].mxu0
        %v1187 = vadd.f32 %v1090, %v1186
        %v1188 = vpop.f32.mrb[0].mxu0
        %1189 = vdwg.mxu0
        %1190 = vmatprep.subr.bf16.mxu0 0
        %1191 = vmatpush1.bf16.msra.mxu0 %v476
        %1192 = vmatprep.subr.bf16.mxu0 0
        %1193 = vmatpush1.bf16.msra.mxu0 %v477
        %1194 = vmatprep.subr.bf16.mxu0 0
        %1195 = vmatpush1.bf16.msra.mxu0 %v478
        %1196 = vmatprep.subr.bf16.mxu0 0
        %1197 = vmatpush1.bf16.msra.mxu0 %v479
        %1198 = vmatprep.subr.bf16.mxu0 0
        %1199 = vmatpush1.bf16.msra.mxu0 %v480
        %1200 = vmatprep.subr.bf16.mxu0 0
        %1201 = vmatpush1.bf16.msra.mxu0 %v481
        %1202 = vmatprep.subr.bf16.mxu0 0
        %1203 = vmatpush1.bf16.msra.mxu0 %v482
        %1204 = vmatprep.subr.bf16.mxu0 0
        %1205 = vmatpush1.bf16.msra.mxu0 %v483
        %1206 = vmatprep.subr.bf16.mxu0 0
        %1207 = vmatpush1.bf16.msra.mxu0 %v484
        %1208 = vmatprep.subr.bf16.mxu0 0
        %1209 = vmatpush1.bf16.msra.mxu0 %v485
        %1210 = vmatprep.subr.bf16.mxu0 0
        %1211 = vmatpush1.bf16.msra.mxu0 %v486
        %1212 = vmatprep.subr.bf16.mxu0 0
        %1213 = vmatpush1.bf16.msra.mxu0 %v487
        %1214 = vmatprep.subr.bf16.mxu0 0
        %1215 = vmatpush1.bf16.msra.mxu0 %v488
        %1216 = vmatprep.subr.bf16.mxu0 0
        %1217 = vmatpush1.bf16.msra.mxu0 %v489
        %1218 = vmatprep.subr.bf16.mxu0 0
        %1219 = vmatpush1.bf16.msra.mxu0 %v490
        %1220 = vmatprep.subr.bf16.mxu0 0
        %1221 = vmatpush1.bf16.msra.mxu0 %v491
        %1222 = vmatprep.mubr.bf16.mxu0 %v808
        %1223 = vmatmul.mubr.bf16.gmra.mrb[0].mxu0 %v807
        %v1224 = vpop.f32.mrb[0].mxu0
        %v1225 = vadd.f32 %v1128, %v1224
        %v1226 = vpop.f32.mrb[0].mxu0
        %v1227 = vpop.f32.mrb[0].mxu0
        %v1228 = vadd.f32 %v1131, %v1227
        %v1229 = vpop.f32.mrb[0].mxu0
        %1230 = vmatprep.mubr.bf16.mxu0 %v819
        %1231 = vmatmul.mubr.bf16.gmra.mrb[0].mxu0 %v818
        %v1232 = vpop.f32.mrb[0].mxu0
        %v1233 = vadd.f32 %v1136, %v1232
        %v1234 = vpop.f32.mrb[0].mxu0
        %v1235 = vpop.f32.mrb[0].mxu0
        %v1236 = vadd.f32 %v1139, %v1235
        %v1237 = vpop.f32.mrb[0].mxu0
        %1238 = vmatprep.mubr.bf16.mxu0 %v830
        %1239 = vmatmul.mubr.bf16.gmra.mrb[0].mxu0 %v829
        %v1240 = vpop.f32.mrb[0].mxu0
        %v1241 = vadd.f32 %v1144, %v1240
        %v1242 = vpop.f32.mrb[0].mxu0
        %v1243 = vpop.f32.mrb[0].mxu0
        %v1244 = vadd.f32 %v1147, %v1243
        %v1245 = vpop.f32.mrb[0].mxu0
        %1246 = vmatprep.mubr.bf16.mxu0 %v841
        %1247 = vmatmul.mubr.bf16.gmra.mrb[0].mxu0 %v840
        %v1248 = vpop.f32.mrb[0].mxu0
        %v1249 = vadd.f32 %v1152, %v1248
        %v1250 = vpop.f32.mrb[0].mxu0
        %v1251 = vpop.f32.mrb[0].mxu0
        %v1252 = vadd.f32 %v1155, %v1251
        %v1253 = vpop.f32.mrb[0].mxu0
        %1254 = vmatprep.mubr.bf16.mxu0 %v852
        %1255 = vmatmul.mubr.bf16.gmra.mrb[0].mxu0 %v851
        %v1256 = vpop.f32.mrb[0].mxu0
        %v1257 = vadd.f32 %v1160, %v1256
        %v1258 = vpop.f32.mrb[0].mxu0
        %v1259 = vpop.f32.mrb[0].mxu0
        %v1260 = vadd.f32 %v1163, %v1259
        %v1261 = vpop.f32.mrb[0].mxu0
        %1262 = vmatprep.mubr.bf16.mxu0 %v863
        %1263 = vmatmul.mubr.bf16.gmra.mrb[0].mxu0 %v862
        %v1264 = vpop.f32.mrb[0].mxu0
        %v1265 = vadd.f32 %v1168, %v1264
        %v1266 = vpop.f32.mrb[0].mxu0
        %v1267 = vpop.f32.mrb[0].mxu0
        %v1268 = vadd.f32 %v1171, %v1267
        %v1269 = vpop.f32.mrb[0].mxu0
        %1270 = vmatprep.mubr.bf16.mxu0 %v874
        %1271 = vmatmul.mubr.bf16.gmra.mrb[0].mxu0 %v873
        %v1272 = vpop.f32.mrb[0].mxu0
        %v1273 = vadd.f32 %v1176, %v1272
        %v1274 = vpop.f32.mrb[0].mxu0
        %v1275 = vpop.f32.mrb[0].mxu0
        %v1276 = vadd.f32 %v1179, %v1275
        %v1277 = vpop.f32.mrb[0].mxu0
        %1278 = vmatprep.mubr.bf16.mxu0 %v885
        %1279 = vmatmul.mubr.bf16.gmra.mrb[0].mxu0 %v884
        %v1280 = vpop.f32.mrb[0].mxu0
        %v1281 = vadd.f32 %v1184, %v1280
        %v1282 = vpop.f32.mrb[0].mxu0
        %v1283 = vpop.f32.mrb[0].mxu0
        %v1284 = vadd.f32 %v1187, %v1283
        %v1285 = vpop.f32.mrb[0].mxu0
        %1286 = vdwg.mxu0
        %1287 = vmatprep.subr.bf16.mxu0 0
        %1288 = vmatpush1.bf16.msra.mxu0 %v492
        %1289 = vmatprep.subr.bf16.mxu0 0
        %1290 = vmatpush1.bf16.msra.mxu0 %v493
        %1291 = vmatprep.subr.bf16.mxu0 0
        %1292 = vmatpush1.bf16.msra.mxu0 %v494
        %1293 = vmatprep.subr.bf16.mxu0 0
        %1294 = vmatpush1.bf16.msra.mxu0 %v495
        %1295 = vmatprep.subr.bf16.mxu0 0
        %1296 = vmatpush1.bf16.msra.mxu0 %v496
        %1297 = vmatprep.subr.bf16.mxu0 0
        %1298 = vmatpush1.bf16.msra.mxu0 %v497
        %1299 = vmatprep.subr.bf16.mxu0 0
        %1300 = vmatpush1.bf16.msra.mxu0 %v498
        %1301 = vmatprep.subr.bf16.mxu0 0
        %1302 = vmatpush1.bf16.msra.mxu0 %v499
        %1303 = vmatprep.subr.bf16.mxu0 0
        %1304 = vmatpush1.bf16.msra.mxu0 %v500
        %1305 = vmatprep.subr.bf16.mxu0 0
        %1306 = vmatpush1.bf16.msra.mxu0 %v501
        %1307 = vmatprep.subr.bf16.mxu0 0
        %1308 = vmatpush1.bf16.msra.mxu0 %v502
        %1309 = vmatprep.subr.bf16.mxu0 0
        %1310 = vmatpush1.bf16.msra.mxu0 %v503
        %1311 = vmatprep.subr.bf16.mxu0 0
        %1312 = vmatpush1.bf16.msra.mxu0 %v504
        %1313 = vmatprep.subr.bf16.mxu0 0
        %1314 = vmatpush1.bf16.msra.mxu0 %v505
        %1315 = vmatprep.subr.bf16.mxu0 0
        %1316 = vmatpush1.bf16.msra.mxu0 %v506
        %1317 = vmatprep.subr.bf16.mxu0 0
        %1318 = vmatpush1.bf16.msra.mxu0 %v507
        %1319 = vmatprep.mubr.bf16.mxu0 %v810
        %1320 = vmatmul.mubr.bf16.gmra.mrb[0].mxu0 %v809
        %v1321 = vpop.f32.mrb[0].mxu0
        %v1322 = vadd.f32 %v1225, %v1321
        %v1323 = vpop.f32.mrb[0].mxu0
        %v1324 = vpop.f32.mrb[0].mxu0
        %v1325 = vadd.f32 %v1228, %v1324
        %v1326 = vpop.f32.mrb[0].mxu0
        %1327 = vmatprep.mubr.bf16.mxu0 %v821
        %1328 = vmatmul.mubr.bf16.gmra.mrb[0].mxu0 %v820
        %v1329 = vpop.f32.mrb[0].mxu0
        %v1330 = vadd.f32 %v1233, %v1329
        %v1331 = vpop.f32.mrb[0].mxu0
        %v1332 = vpop.f32.mrb[0].mxu0
        %v1333 = vadd.f32 %v1236, %v1332
        %v1334 = vpop.f32.mrb[0].mxu0
        %1335 = vmatprep.mubr.bf16.mxu0 %v832
        %1336 = vmatmul.mubr.bf16.gmra.mrb[0].mxu0 %v831
        %v1337 = vpop.f32.mrb[0].mxu0
        %v1338 = vadd.f32 %v1241, %v1337
        %v1339 = vpop.f32.mrb[0].mxu0
        %v1340 = vpop.f32.mrb[0].mxu0
        %v1341 = vadd.f32 %v1244, %v1340
        %v1342 = vpop.f32.mrb[0].mxu0
        %1343 = vmatprep.mubr.bf16.mxu0 %v843
        %1344 = vmatmul.mubr.bf16.gmra.mrb[0].mxu0 %v842
        %v1345 = vpop.f32.mrb[0].mxu0
        %v1346 = vadd.f32 %v1249, %v1345
        %v1347 = vpop.f32.mrb[0].mxu0
        %v1348 = vpop.f32.mrb[0].mxu0
        %v1349 = vadd.f32 %v1252, %v1348
        %v1350 = vpop.f32.mrb[0].mxu0
        %1351 = vmatprep.mubr.bf16.mxu0 %v854
        %1352 = vmatmul.mubr.bf16.gmra.mrb[0].mxu0 %v853
        %v1353 = vpop.f32.mrb[0].mxu0
        %v1354 = vadd.f32 %v1257, %v1353
        %v1355 = vpop.f32.mrb[0].mxu0
        %v1356 = vpop.f32.mrb[0].mxu0
        %v1357 = vadd.f32 %v1260, %v1356
        %v1358 = vpop.f32.mrb[0].mxu0
        %1359 = vmatprep.mubr.bf16.mxu0 %v865
        %1360 = vmatmul.mubr.bf16.gmra.mrb[0].mxu0 %v864
        %v1361 = vpop.f32.mrb[0].mxu0
        %v1362 = vadd.f32 %v1265, %v1361
        %v1363 = vpop.f32.mrb[0].mxu0
        %v1364 = vpop.f32.mrb[0].mxu0
        %v1365 = vadd.f32 %v1268, %v1364
        %v1366 = vpop.f32.mrb[0].mxu0
        %1367 = vmatprep.mubr.bf16.mxu0 %v876
        %1368 = vmatmul.mubr.bf16.gmra.mrb[0].mxu0 %v875
        %v1369 = vpop.f32.mrb[0].mxu0
        %v1370 = vadd.f32 %v1273, %v1369
        %v1371 = vpop.f32.mrb[0].mxu0
        %v1372 = vpop.f32.mrb[0].mxu0
        %v1373 = vadd.f32 %v1276, %v1372
        %v1374 = vpop.f32.mrb[0].mxu0
        %1375 = vmatprep.mubr.bf16.mxu0 %v887
        %1376 = vmatmul.mubr.bf16.gmra.mrb[0].mxu0 %v886
        %v1377 = vpop.f32.mrb[0].mxu0
        %v1378 = vadd.f32 %v1281, %v1377
        %v1379 = vpop.f32.mrb[0].mxu0
        %v1380 = vpop.f32.mrb[0].mxu0
        %v1381 = vadd.f32 %v1284, %v1380
        %v1382 = vpop.f32.mrb[0].mxu0
        %1383 = vdwg.mxu0
        %1384 = vmatprep.subr.bf16.mxu0 0
        %1385 = vmatpush1.bf16.msra.mxu0 %v508
        %1386 = vmatprep.subr.bf16.mxu0 0
        %1387 = vmatpush1.bf16.msra.mxu0 %v509
        %1388 = vmatprep.subr.bf16.mxu0 0
        %1389 = vmatpush1.bf16.msra.mxu0 %v510
        %1390 = vmatprep.subr.bf16.mxu0 0
        %1391 = vmatpush1.bf16.msra.mxu0 %v511
        %1392 = vmatprep.subr.bf16.mxu0 0
        %1393 = vmatpush1.bf16.msra.mxu0 %v512
        %1394 = vmatprep.subr.bf16.mxu0 0
        %1395 = vmatpush1.bf16.msra.mxu0 %v513
        %1396 = vmatprep.subr.bf16.mxu0 0
        %1397 = vmatpush1.bf16.msra.mxu0 %v514
        %1398 = vmatprep.subr.bf16.mxu0 0
        %1399 = vmatpush1.bf16.msra.mxu0 %v515
        %1400 = vmatprep.subr.bf16.mxu0 0
        %1401 = vmatpush1.bf16.msra.mxu0 %v516
        %1402 = vmatprep.subr.bf16.mxu0 0
        %1403 = vmatpush1.bf16.msra.mxu0 %v517
        %1404 = vmatprep.subr.bf16.mxu0 0
        %1405 = vmatpush1.bf16.msra.mxu0 %v518
        %1406 = vmatprep.subr.bf16.mxu0 0
        %1407 = vmatpush1.bf16.msra.mxu0 %v519
        %1408 = vmatprep.subr.bf16.mxu0 0
        %1409 = vmatpush1.bf16.msra.mxu0 %v520
        %1410 = vmatprep.subr.bf16.mxu0 0
        %1411 = vmatpush1.bf16.msra.mxu0 %v521
        %1412 = vmatprep.subr.bf16.mxu0 0
        %1413 = vmatpush1.bf16.msra.mxu0 %v522
        %1414 = vmatprep.subr.bf16.mxu0 0
        %1415 = vmatpush1.bf16.msra.mxu0 %v523
        %1416 = vmatprep.mubr.bf16.mxu0 %v812
        %1417 = vmatmul.mubr.bf16.gmra.mrb[0].mxu0 %v811
        %v1418 = vpop.f32.mrb[0].mxu0
        %v1419 = vadd.f32 %v1322, %v1418
        %v1420 = vpop.f32.mrb[0].mxu0
        %v1421 = vpop.f32.mrb[0].mxu0
        %v1422 = vadd.f32 %v1325, %v1421
        %v1423 = vpop.f32.mrb[0].mxu0
        %1424 = vmatprep.mubr.bf16.mxu0 %v823
        %1425 = vmatmul.mubr.bf16.gmra.mrb[0].mxu0 %v822
        %v1426 = vpop.f32.mrb[0].mxu0
        %v1427 = vadd.f32 %v1330, %v1426
        %v1428 = vpop.f32.mrb[0].mxu0
        %v1429 = vpop.f32.mrb[0].mxu0
        %v1430 = vadd.f32 %v1333, %v1429
        %v1431 = vpop.f32.mrb[0].mxu0
        %1432 = vmatprep.mubr.bf16.mxu0 %v834
        %1433 = vmatmul.mubr.bf16.gmra.mrb[0].mxu0 %v833
        %v1434 = vpop.f32.mrb[0].mxu0
        %v1435 = vadd.f32 %v1338, %v1434
        %v1436 = vpop.f32.mrb[0].mxu0
        %v1437 = vpop.f32.mrb[0].mxu0
        %v1438 = vadd.f32 %v1341, %v1437
        %v1439 = vpop.f32.mrb[0].mxu0
        %1440 = vmatprep.mubr.bf16.mxu0 %v845
        %1441 = vmatmul.mubr.bf16.gmra.mrb[0].mxu0 %v844
        %v1442 = vpop.f32.mrb[0].mxu0
        %v1443 = vadd.f32 %v1346, %v1442
        %v1444 = vpop.f32.mrb[0].mxu0
        %v1445 = vpop.f32.mrb[0].mxu0
        %v1446 = vadd.f32 %v1349, %v1445
        %v1447 = vpop.f32.mrb[0].mxu0
        %1448 = vmatprep.mubr.bf16.mxu0 %v856
        %1449 = vmatmul.mubr.bf16.gmra.mrb[0].mxu0 %v855
        %v1450 = vpop.f32.mrb[0].mxu0
        %v1451 = vadd.f32 %v1354, %v1450
        %v1452 = vpop.f32.mrb[0].mxu0
        %v1453 = vpop.f32.mrb[0].mxu0
        %v1454 = vadd.f32 %v1357, %v1453
        %v1455 = vpop.f32.mrb[0].mxu0
        %1456 = vmatprep.mubr.bf16.mxu0 %v867
        %1457 = vmatmul.mubr.bf16.gmra.mrb[0].mxu0 %v866
        %v1458 = vpop.f32.mrb[0].mxu0
        %v1459 = vadd.f32 %v1362, %v1458
        %v1460 = vpop.f32.mrb[0].mxu0
        %v1461 = vpop.f32.mrb[0].mxu0
        %v1462 = vadd.f32 %v1365, %v1461
        %v1463 = vpop.f32.mrb[0].mxu0
        %1464 = vmatprep.mubr.bf16.mxu0 %v878
        %1465 = vmatmul.mubr.bf16.gmra.mrb[0].mxu0 %v877
        %v1466 = vpop.f32.mrb[0].mxu0
        %v1467 = vadd.f32 %v1370, %v1466
        %v1468 = vpop.f32.mrb[0].mxu0
        %v1469 = vpop.f32.mrb[0].mxu0
        %v1470 = vadd.f32 %v1373, %v1469
        %v1471 = vpop.f32.mrb[0].mxu0
        %1472 = vmatprep.mubr.bf16.mxu0 %v889
        %1473 = vmatmul.mubr.bf16.gmra.mrb[0].mxu0 %v888
        %v1474 = vpop.f32.mrb[0].mxu0
        %v1475 = vadd.f32 %v1378, %v1474
        %v1476 = vpop.f32.mrb[0].mxu0
        %v1477 = vpop.f32.mrb[0].mxu0
        %v1478 = vadd.f32 %v1381, %v1477
        %v1479 = vpop.f32.mrb[0].mxu0
        %1480 = vdwg.mxu0
        %1481 = vmatprep.subr.bf16.mxu0 0
        %1482 = vmatpush1.bf16.msra.mxu0 %v524
        %1483 = vmatprep.subr.bf16.mxu0 0
        %1484 = vmatpush1.bf16.msra.mxu0 %v525
        %1485 = vmatprep.subr.bf16.mxu0 0
        %1486 = vmatpush1.bf16.msra.mxu0 %v526
        %1487 = vmatprep.subr.bf16.mxu0 0
        %1488 = vmatpush1.bf16.msra.mxu0 %v527
        %1489 = vmatprep.subr.bf16.mxu0 0
        %1490 = vmatpush1.bf16.msra.mxu0 %v528
        %1491 = vmatprep.subr.bf16.mxu0 0
        %1492 = vmatpush1.bf16.msra.mxu0 %v529
        %1493 = vmatprep.subr.bf16.mxu0 0
        %1494 = vmatpush1.bf16.msra.mxu0 %v530
        %1495 = vmatprep.subr.bf16.mxu0 0
        %1496 = vmatpush1.bf16.msra.mxu0 0
        %1497 = vmatprep.subr.bf16.mxu0 0
        %1498 = vmatpush1.bf16.msra.mxu0 0
        %1499 = vmatprep.subr.bf16.mxu0 0
        %1500 = vmatpush1.bf16.msra.mxu0 0
        %1501 = vmatprep.subr.bf16.mxu0 0
        %1502 = vmatpush1.bf16.msra.mxu0 0
        %1503 = vmatprep.subr.bf16.mxu0 0
        %1504 = vmatpush1.bf16.msra.mxu0 0
        %1505 = vmatprep.subr.bf16.mxu0 0
        %1506 = vmatpush1.bf16.msra.mxu0 0
        %1507 = vmatprep.subr.bf16.mxu0 0
        %1508 = vmatpush1.bf16.msra.mxu0 0
        %1509 = vmatprep.subr.bf16.mxu0 0
        %1510 = vmatpush1.bf16.msra.mxu0 0
        %1511 = vmatprep.subr.bf16.mxu0 0
        %1512 = vmatpush1.bf16.msra.mxu0 0
        %1513 = vmatprep.mubr.bf16.mxu0 0
        %1514 = vmatmul.mubr.bf16.gmra.mrb[0].mxu0 %v973
        %v1515 = vpop.f32.mrb[0].mxu0
        %v1516 = vadd.f32 %v1419, %v1515
        %v1517 = vpop.f32.mrb[0].mxu0
        %v1518 = vpop.f32.mrb[0].mxu0
        %v1519 = vadd.f32 %v1422, %v1518
        %v1520 = vpop.f32.mrb[0].mxu0
        %1521 = vmatprep.mubr.bf16.mxu0 0
        %1522 = vmatmul.mubr.bf16.gmra.mrb[0].mxu0 %v976
        %v1523 = vpop.f32.mrb[0].mxu0
        %v1524 = vadd.f32 %v1427, %v1523
        %v1525 = vpop.f32.mrb[0].mxu0
        %v1526 = vpop.f32.mrb[0].mxu0
        %v1527 = vadd.f32 %v1430, %v1526
        %v1528 = vpop.f32.mrb[0].mxu0
        %1529 = vmatprep.mubr.bf16.mxu0 0
        %1530 = vmatmul.mubr.bf16.gmra.mrb[0].mxu0 %v979
        %v1531 = vpop.f32.mrb[0].mxu0
        %v1532 = vadd.f32 %v1435, %v1531
        %v1533 = vpop.f32.mrb[0].mxu0
        %v1534 = vpop.f32.mrb[0].mxu0
        %v1535 = vadd.f32 %v1438, %v1534
        %v1536 = vpop.f32.mrb[0].mxu0
        %1537 = vmatprep.mubr.bf16.mxu0 0
        %1538 = vmatmul.mubr.bf16.gmra.mrb[0].mxu0 %v982
        %v1539 = vpop.f32.mrb[0].mxu0
        %v1540 = vadd.f32 %v1443, %v1539
        %v1541 = vpop.f32.mrb[0].mxu0
        %v1542 = vpop.f32.mrb[0].mxu0
        %v1543 = vadd.f32 %v1446, %v1542
        %v1544 = vpop.f32.mrb[0].mxu0
        %1545 = vmatprep.mubr.bf16.mxu0 0
        %1546 = vmatmul.mubr.bf16.gmra.mrb[0].mxu0 %v985
        %v1547 = vpop.f32.mrb[0].mxu0
        %v1548 = vadd.f32 %v1451, %v1547
        %v1549 = vpop.f32.mrb[0].mxu0
        %v1550 = vpop.f32.mrb[0].mxu0
        %v1551 = vadd.f32 %v1454, %v1550
        %v1552 = vpop.f32.mrb[0].mxu0
        %1553 = vmatprep.mubr.bf16.mxu0 0
        %1554 = vmatmul.mubr.bf16.gmra.mrb[0].mxu0 %v988
        %v1555 = vpop.f32.mrb[0].mxu0
        %v1556 = vadd.f32 %v1459, %v1555
        %v1557 = vpop.f32.mrb[0].mxu0
        %v1558 = vpop.f32.mrb[0].mxu0
        %v1559 = vadd.f32 %v1462, %v1558
        %v1560 = vpop.f32.mrb[0].mxu0
        %1561 = vmatprep.mubr.bf16.mxu0 0
        %1562 = vmatmul.mubr.bf16.gmra.mrb[0].mxu0 %v991
        %v1563 = vpop.f32.mrb[0].mxu0
        %v1564 = vadd.f32 %v1467, %v1563
        %v1565 = vpop.f32.mrb[0].mxu0
        %v1566 = vpop.f32.mrb[0].mxu0
        %v1567 = vadd.f32 %v1470, %v1566
        %v1568 = vpop.f32.mrb[0].mxu0
        %1569 = vmatprep.mubr.bf16.mxu0 0
        %1570 = vmatmul.mubr.bf16.gmra.mrb[0].mxu0 %v994
        %v1571 = vpop.f32.mrb[0].mxu0
        %v1572 = vadd.f32 %v1475, %v1571
        %v1573 = vpop.f32.mrb[0].mxu0
        %v1574 = vpop.f32.mrb[0].mxu0
        %v1575 = vadd.f32 %v1478, %v1574
        %v1576 = vpop.f32.mrb[0].mxu0
        %1577 = vdwg.mxu0
        %vm1578 = vcmask 400384
        %1579 = vst.msk [vmem:[%s150] sm:$0xff] %vm1578, %v1516
        %1580 = vst.msk [vmem:[%s150 + $0x8] sm:$0xff] %vm1578, %v1519
        %1581 = vst.msk [vmem:[%s150 + $0x10] sm:$0xff] %vm1578, %v1524
        %1582 = vst.msk [vmem:[%s150 + $0x18] sm:$0xff] %vm1578, %v1527
        %1583 = vst.msk [vmem:[%s150 + $0x20] sm:$0xff] %vm1578, %v1532
        %1584 = vst.msk [vmem:[%s150 + $0x28] sm:$0xff] %vm1578, %v1535
        %1585 = vst.msk [vmem:[%s150 + $0x30] sm:$0xff] %vm1578, %v1540
        %1586 = vst.msk [vmem:[%s150 + $0x38] sm:$0xff] %vm1578, %v1543
        %1587 = vst.msk [vmem:[%s150 + $0x40] sm:$0xff] %vm1578, %v1548
        %1588 = vst.msk [vmem:[%s150 + $0x48] sm:$0xff] %vm1578, %v1551
        %1589 = vst.msk [vmem:[%s150 + $0x50] sm:$0xff] %vm1578, %v1556
        %1590 = vst.msk [vmem:[%s150 + $0x58] sm:$0xff] %vm1578, %v1559
        %1591 = vst.msk [vmem:[%s150 + $0x60] sm:$0xff] %vm1578, %v1564
        %1592 = vst.msk [vmem:[%s150 + $0x68] sm:$0xff] %vm1578, %v1567
        %1593 = vst.msk [vmem:[%s150 + $0x70] sm:$0xff] %vm1578, %v1572
        %1594 = vst.msk [vmem:[%s150 + $0x78] sm:$0xff] %vm1578, %v1575
        %s1595 = sand.u32 %s68, 1
        %s1596 = sand.u32 %s68, 1
        %s1597 = smul.addr %s1596, 128
        %s1598 = scalar_lea.vmem [#allocation2], %s1597
        // Predicated region
        $region29: #{conv2d_1x1.1} parent=27 // pred_check
          %p1599 = pneg %p78
        $region30: #{conv2d_1x1.1} parent=27 // pred_check_branch
          %1601 = sbr.rel (%p1599) target = $region32
        $region31: #{conv2d_1x1.1} parent=27 // pred_region
          %s1602 = smul.u32 16, %s13
          %s1603 = ssub.s32 29, %s1602
          %p1604 = scmp.lt.s32.totalorder %s1603, 16
          %s1605 = scalar_select %p1604, %s1603, 16
          %s1606 = smul.u32 128, %s1605
          %p1607 = scmp.ne.s32.totalorder 0, %s1606
          %s1608 = smul.addr %s1602, 8
          %s1609 = scalar_lea.vmem %s2, %s1608
          // Predicated region
          $region33: #{conv2d_1x1.1} parent=31 // pred_check
            %p1610 = pneg %p1607
          $region34: #{conv2d_1x1.1} parent=31 // pred_check_branch
            %1612 = sbr.rel (%p1610) target = $region36
          $region35: #{conv2d_1x1.1} parent=31 // pred_region
            // Predicated region
            $region37: #{conv2d_1x1.1} parent=35 // pred_check
              _
            $region38: #{conv2d_1x1.1} parent=35 // pred_check_branch
              %1614 = sbr.rel (0) target = $region40
            $region39: #{conv2d_1x1.1} parent=35 // pred_region
              // Predicated region
              $region59: #{conv2d_1x1.1} parent=39 // pred_check
                _
              $region60: #{conv2d_1x1.1} parent=39 // pred_check_branch
                %1693 = sbr.rel (0) target = $region62
              $region61: #{conv2d_1x1.1} parent=39 // pred_region
                %s1694 = sshrl.u32 %s1605, 4
                // While loop
                $region63: #{conv2d_1x1.1} parent=61 // loop_pre_header
                  _
                $region64: #{conv2d_1x1.1} parent=61 // loop_header
                  %s1696 = sphi 0, %s1698
                  %p1697 = scmp.ge.s32.totalorder %s1696, %s1694
                  %s1701 = sphi 0, %s1738
                  %s1702 = sphi %s1598, %s1741
                  %s1703 = sphi %s1609, %s1742
                $region65: #{conv2d_1x1.1} parent=61 // loop_header_branch
                  %1700 = sbr.rel (%p1697) target = $region69
                $region66: #{conv2d_1x1.1} parent=61 // loop_body
                  %v1704 = vld [vmem:[%s1702] sm:$0xff]
                  %1705 = vst [vmem:[%s1703] sm:$0xff] %v1704
                  %v1706 = vld [vmem:[%s1702 + $0x8] sm:$0xff]
                  %1707 = vst [vmem:[%s1703 + $0x8] sm:$0xff] %v1706
                  %v1708 = vld [vmem:[%s1702 + $0x10] sm:$0xff]
                  %1709 = vst [vmem:[%s1703 + $0x10] sm:$0xff] %v1708
                  %v1710 = vld [vmem:[%s1702 + $0x18] sm:$0xff]
                  %1711 = vst [vmem:[%s1703 + $0x18] sm:$0xff] %v1710
                  %v1712 = vld [vmem:[%s1702 + $0x20] sm:$0xff]
                  %1713 = vst [vmem:[%s1703 + $0x20] sm:$0xff] %v1712
                  %v1714 = vld [vmem:[%s1702 + $0x28] sm:$0xff]
                  %1715 = vst [vmem:[%s1703 + $0x28] sm:$0xff] %v1714
                  %v1716 = vld [vmem:[%s1702 + $0x30] sm:$0xff]
                  %1717 = vst [vmem:[%s1703 + $0x30] sm:$0xff] %v1716
                  %v1718 = vld [vmem:[%s1702 + $0x38] sm:$0xff]
                  %1719 = vst [vmem:[%s1703 + $0x38] sm:$0xff] %v1718
                  %v1720 = vld [vmem:[%s1702 + $0x40] sm:$0xff]
                  %1721 = vst [vmem:[%s1703 + $0x40] sm:$0xff] %v1720
                  %v1722 = vld [vmem:[%s1702 + $0x48] sm:$0xff]
                  %1723 = vst [vmem:[%s1703 + $0x48] sm:$0xff] %v1722
                  %v1724 = vld [vmem:[%s1702 + $0x50] sm:$0xff]
                  %1725 = vst [vmem:[%s1703 + $0x50] sm:$0xff] %v1724
                  %v1726 = vld [vmem:[%s1702 + $0x58] sm:$0xff]
                  %1727 = vst [vmem:[%s1703 + $0x58] sm:$0xff] %v1726
                  %v1728 = vld [vmem:[%s1702 + $0x60] sm:$0xff]
                  %1729 = vst [vmem:[%s1703 + $0x60] sm:$0xff] %v1728
                  %v1730 = vld [vmem:[%s1702 + $0x68] sm:$0xff]
                  %1731 = vst [vmem:[%s1703 + $0x68] sm:$0xff] %v1730
                  %v1732 = vld [vmem:[%s1702 + $0x70] sm:$0xff]
                  %1733 = vst [vmem:[%s1703 + $0x70] sm:$0xff] %v1732
                  %v1734 = vld [vmem:[%s1702 + $0x78] sm:$0xff]
                  %1735 = vst [vmem:[%s1703 + $0x78] sm:$0xff] %v1734
                  %s1736 = sadd.s32 1, %s1701
                  %p1737 = scmp.ge.s32.totalorder %s1736, %s1694
                  %s1738 = scalar_select %p1737, 0, %s1736
                  %s1739 = smul.u32 %s1738, 128
                  %s1740 = smul.u32 %s1738, 128
                  %s1741 = scalar_lea.vmem %s1598, %s1739 [#allocation2]
                  %s1742 = scalar_lea.vmem %s1609, %s1740
                $region67: #{conv2d_1x1.1} parent=61 // loop_footer
                  %s1698 = sadd.s32 %s1696, 1
                $region68: #{conv2d_1x1.1} parent=61 // loop_footer_branch
                  %1695 = sbr.rel target = $region64
                $region69: #{conv2d_1x1.1} parent=61 // loop_exit
                  _
                %s1743 = sshrl.u32 %s1605, 4
                %s1744 = sand.u32 %s1605, 15
                %s1745 = smul.u32 %s1743, 16
                %s1746 = smul.u32 8, %s1745
                %s1747 = scalar_lea.vmem %s1598, %s1746 [#allocation2]
                %s1748 = smul.u32 8, %s1745
                %s1749 = scalar_lea.vmem %s1609, %s1748
                // While loop
                $region70: #{conv2d_1x1.1} parent=61 // loop_pre_header
                  _
                $region71: #{conv2d_1x1.1} parent=61 // loop_header
                  %s1751 = sphi 0, %s1753
                  %p1752 = scmp.ge.s32.totalorder %s1751, %s1744
                  %s1756 = sphi 0, %s1763
                  %s1757 = sphi %s1747, %s1766
                  %s1758 = sphi %s1749, %s1767
                $region72: #{conv2d_1x1.1} parent=61 // loop_header_branch
                  %1755 = sbr.rel (%p1752) target = $region76
                $region73: #{conv2d_1x1.1} parent=61 // loop_body
                  %v1759 = vld [vmem:[%s1757] sm:$0xff]
                  %1760 = vst [vmem:[%s1758] sm:$0xff] %v1759
                  %s1761 = sadd.s32 1, %s1756
                  %p1762 = scmp.ge.s32.totalorder %s1761, %s1744
                  %s1763 = scalar_select %p1762, 0, %s1761
                  %s1764 = smul.u32 %s1763, 8
                  %s1765 = smul.u32 %s1763, 8
                  %s1766 = scalar_lea.vmem %s1747, %s1764 [#allocation2]
                  %s1767 = scalar_lea.vmem %s1749, %s1765
                $region74: #{conv2d_1x1.1} parent=61 // loop_footer
                  %s1753 = sadd.s32 %s1751, 1
                $region75: #{conv2d_1x1.1} parent=61 // loop_footer_branch
                  %1750 = sbr.rel target = $region71
                $region76: #{conv2d_1x1.1} parent=61 // loop_exit
                  _
              $region62: #{conv2d_1x1.1} parent=39 // pred_fallthru
                _
              // Predicated region
              $region77: #{conv2d_1x1.1} parent=39 // pred_check
                _
              $region78: #{conv2d_1x1.1} parent=39 // pred_check_branch
                %1769 = sbr.rel target = $region80
              $region79: #{conv2d_1x1.1} parent=39 // pred_region
                _
              $region80: #{conv2d_1x1.1} parent=39 // pred_fallthru
                _
            $region40: #{conv2d_1x1.1} parent=35 // pred_fallthru
              _
            // Predicated region
            $region41: #{conv2d_1x1.1} parent=35 // pred_check
              _
            $region42: #{conv2d_1x1.1} parent=35 // pred_check_branch
              %1616 = sbr.rel target = $region44
            $region43: #{conv2d_1x1.1} parent=35 // pred_region
              %s1618 = sshrl.u32 %s1605, 4
              // While loop
              $region45: #{conv2d_1x1.1} parent=43 // loop_pre_header
                _
              $region46: #{conv2d_1x1.1} parent=43 // loop_header
                %s1620 = sphi 0, %s1622
                %p1621 = scmp.ge.s32.totalorder %s1620, %s1618
                %s1625 = sphi 0, %s1662
                %s1626 = sphi %s1598, %s1665
                %s1627 = sphi %s1609, %s1666
              $region47: #{conv2d_1x1.1} parent=43 // loop_header_branch
                %1624 = sbr.rel (%p1621) target = $region51
              $region48: #{conv2d_1x1.1} parent=43 // loop_body
                %v1628 = vld [vmem:[%s1626] sm:$0xff]
                %1629 = vst [vmem:[%s1627] sm:$0xff] %v1628
                %v1630 = vld [vmem:[%s1626 + $0x8] sm:$0xff]
                %1631 = vst [vmem:[%s1627 + $0x8] sm:$0xff] %v1630
                %v1632 = vld [vmem:[%s1626 + $0x10] sm:$0xff]
                %1633 = vst [vmem:[%s1627 + $0x10] sm:$0xff] %v1632
                %v1634 = vld [vmem:[%s1626 + $0x18] sm:$0xff]
                %1635 = vst [vmem:[%s1627 + $0x18] sm:$0xff] %v1634
                %v1636 = vld [vmem:[%s1626 + $0x20] sm:$0xff]
                %1637 = vst [vmem:[%s1627 + $0x20] sm:$0xff] %v1636
                %v1638 = vld [vmem:[%s1626 + $0x28] sm:$0xff]
                %1639 = vst [vmem:[%s1627 + $0x28] sm:$0xff] %v1638
                %v1640 = vld [vmem:[%s1626 + $0x30] sm:$0xff]
                %1641 = vst [vmem:[%s1627 + $0x30] sm:$0xff] %v1640
                %v1642 = vld [vmem:[%s1626 + $0x38] sm:$0xff]
                %1643 = vst [vmem:[%s1627 + $0x38] sm:$0xff] %v1642
                %v1644 = vld [vmem:[%s1626 + $0x40] sm:$0xff]
                %1645 = vst [vmem:[%s1627 + $0x40] sm:$0xff] %v1644
                %v1646 = vld [vmem:[%s1626 + $0x48] sm:$0xff]
                %1647 = vst [vmem:[%s1627 + $0x48] sm:$0xff] %v1646
                %v1648 = vld [vmem:[%s1626 + $0x50] sm:$0xff]
                %1649 = vst [vmem:[%s1627 + $0x50] sm:$0xff] %v1648
                %v1650 = vld [vmem:[%s1626 + $0x58] sm:$0xff]
                %1651 = vst [vmem:[%s1627 + $0x58] sm:$0xff] %v1650
                %v1652 = vld [vmem:[%s1626 + $0x60] sm:$0xff]
                %1653 = vst [vmem:[%s1627 + $0x60] sm:$0xff] %v1652
                %v1654 = vld [vmem:[%s1626 + $0x68] sm:$0xff]
                %1655 = vst [vmem:[%s1627 + $0x68] sm:$0xff] %v1654
                %v1656 = vld [vmem:[%s1626 + $0x70] sm:$0xff]
                %1657 = vst [vmem:[%s1627 + $0x70] sm:$0xff] %v1656
                %v1658 = vld [vmem:[%s1626 + $0x78] sm:$0xff]
                %1659 = vst [vmem:[%s1627 + $0x78] sm:$0xff] %v1658
                %s1660 = sadd.s32 1, %s1625
                %p1661 = scmp.ge.s32.totalorder %s1660, %s1618
                %s1662 = scalar_select %p1661, 0, %s1660
                %s1663 = smul.u32 %s1662, 128
                %s1664 = smul.u32 %s1662, 128
                %s1665 = scalar_lea.vmem %s1598, %s1663 [#allocation2]
                %s1666 = scalar_lea.vmem %s1609, %s1664
              $region49: #{conv2d_1x1.1} parent=43 // loop_footer
                %s1622 = sadd.s32 %s1620, 1
              $region50: #{conv2d_1x1.1} parent=43 // loop_footer_branch
                %1619 = sbr.rel target = $region46
              $region51: #{conv2d_1x1.1} parent=43 // loop_exit
                _
              %s1667 = sshrl.u32 %s1605, 4
              %s1668 = sand.u32 %s1605, 15
              %s1669 = smul.u32 %s1667, 16
              %s1670 = smul.u32 8, %s1669
              %s1671 = scalar_lea.vmem %s1598, %s1670 [#allocation2]
              %s1672 = smul.u32 8, %s1669
              %s1673 = scalar_lea.vmem %s1609, %s1672
              // While loop
              $region52: #{conv2d_1x1.1} parent=43 // loop_pre_header
                _
              $region53: #{conv2d_1x1.1} parent=43 // loop_header
                %s1675 = sphi 0, %s1677
                %p1676 = scmp.ge.s32.totalorder %s1675, %s1668
                %s1680 = sphi 0, %s1687
                %s1681 = sphi %s1671, %s1690
                %s1682 = sphi %s1673, %s1691
              $region54: #{conv2d_1x1.1} parent=43 // loop_header_branch
                %1679 = sbr.rel (%p1676) target = $region58
              $region55: #{conv2d_1x1.1} parent=43 // loop_body
                %v1683 = vld [vmem:[%s1681] sm:$0xff]
                %1684 = vst [vmem:[%s1682] sm:$0xff] %v1683
                %s1685 = sadd.s32 1, %s1680
                %p1686 = scmp.ge.s32.totalorder %s1685, %s1668
                %s1687 = scalar_select %p1686, 0, %s1685
                %s1688 = smul.u32 %s1687, 8
                %s1689 = smul.u32 %s1687, 8
                %s1690 = scalar_lea.vmem %s1671, %s1688 [#allocation2]
                %s1691 = scalar_lea.vmem %s1673, %s1689
              $region56: #{conv2d_1x1.1} parent=43 // loop_footer
                %s1677 = sadd.s32 %s1675, 1
              $region57: #{conv2d_1x1.1} parent=43 // loop_footer_branch
                %1674 = sbr.rel target = $region53
              $region58: #{conv2d_1x1.1} parent=43 // loop_exit
                _
            $region44: #{conv2d_1x1.1} parent=35 // pred_fallthru
              _
          $region36: #{conv2d_1x1.1} parent=31 // pred_fallthru
            _
          %1770 = vnop
        $region32: #{conv2d_1x1.1} parent=27 // pred_fallthru
          _
      $region28: #{conv2d_1x1.1} parent=5 // pred_fallthru
        _
      %p1771 = scmp.le.s32.totalorder 2, %s8
      // Predicated region
      $region81: #{conv2d_1x1.1} parent=5 // pred_check
        %p1772 = pneg %p1771
      $region82: #{conv2d_1x1.1} parent=5 // pred_check_branch
        %1774 = sbr.rel (%p1772) target = $region84
      $region83: #{conv2d_1x1.1} parent=5 // pred_region
        %s1775 = ssub.s32 %s8, 2
        // Predicated region
        $region85: #{conv2d_1x1.1} parent=83 // pred_check
          %p1776 = pneg %p84
        $region86: #{conv2d_1x1.1} parent=83 // pred_check_branch
          %1778 = sbr.rel (%p1776) target = $region88
        $region87: #{conv2d_1x1.1} parent=83 // pred_region
          %s1779 = sand.u32 %s69, 1
          %s1780 = sand.u32 %s69, 1
          %s1781 = smul.addr %s1780, 128
          %s1782 = scalar_lea.vmem [#allocation2], %s1781
        $region88: #{conv2d_1x1.1} parent=83 // pred_fallthru
          _
      $region84: #{conv2d_1x1.1} parent=5 // pred_fallthru
        _
    $region6: #{conv2d_1x1.1} parent=1 // loop_footer
      %s12 = sadd.s32 1, %s8
    $region7: #{conv2d_1x1.1} parent=1 // loop_footer_branch
      %7 = sbr.rel target = $region3
    $region8: #{conv2d_1x1.1} parent=1 // loop_exit
      _

</llo_original>
